<compile_context>
chip_gen: v7x
topology: tpu7x:2x2x1
jax: 0.10.0
libtpu: 0.0.40
codegen_flags: <defaults>
</compile_context>

<pallas_src>
import functools

import jax
import jax.numpy as jnp
from jax.experimental import pallas as pl
from jax.experimental.pallas import tpu as pltpu


def goal_dqn_kernel(x_ref, w1_ref, w2_ref, ew2_ref, b2_ref, eb2_ref,
                    w3v_ref, w3e_ref, b3_ref, out_ref):
    x = x_ref[...]                                                  # (TB, 8) f32

    # Fused layer 1 (both heads); bias folded into the augmented weight row.
    h0 = jnp.dot(x, w1_ref[...], preferred_element_type=jnp.float32)  # (TB, 512)
    h0 = jnp.maximum(h0, 0.0)
    h = h0[:, :256]                                                 # value head
    g = h0[:, 256:]                                                 # est head

    # Layer 2: bf16 operands on the MXU, f32 accumulation; elementwise in f32.
    h = jnp.dot(h.astype(jnp.bfloat16), w2_ref[...],
                preferred_element_type=jnp.float32) + b2_ref[...]
    g = jnp.dot(g.astype(jnp.bfloat16), ew2_ref[...],
                preferred_element_type=jnp.float32) + eb2_ref[...]
    h = jnp.maximum(h, 0.0)
    g = jnp.maximum(g, 0.0)

    # Layer 3: two (256,8) matmuls summed into one (TB,8) slab (no concat).
    z = (jnp.dot(h, w3v_ref[...], preferred_element_type=jnp.float32)
         + jnp.dot(g, w3e_ref[...], preferred_element_type=jnp.float32)
         + b3_ref[...])

    # LogSoftmax over the 2 est columns (cols 4:6) via explicit logaddexp.
    za = z[:, 4:5]
    zb = z[:, 5:6]
    m = jnp.maximum(za, zb)
    lse = m + jnp.log(jnp.exp(za - m) + jnp.exp(zb - m))            # (TB, 1)

    col = jax.lax.broadcasted_iota(jnp.int32, z.shape, 1)
    is_est = jnp.logical_and(col >= 4, col < 6)
    out_ref[...] = jnp.where(is_est, z - lse, z)


def fuse_params(p):
    """Pre-fuse per-layer parameters into the kernel's resident layout."""
    f32 = jnp.float32
    # Layer 1: [w1 | ew1] with bias row and a zero pad row -> (8, 512).
    w1cat = jnp.concatenate([p["w1"], p["ew1"]], axis=1)            # (6, 512)
    b1cat = jnp.concatenate([p["b1"], p["eb1"]], axis=1)            # (1, 512)
    w1a = jnp.concatenate([w1cat, b1cat, jnp.zeros((1, 512), f32)], axis=0)
    # Layer 2 weights resident in bf16 (f32 accumulate on the MXU).
    w2 = p["w2"].astype(jnp.bfloat16)                               # (256, 256)
    ew2 = p["ew2"].astype(jnp.bfloat16)                             # (256, 256)
    # Layer 3: value weights in cols 0:4, est weights in cols 4:6, rest zero.
    w3v = jnp.zeros((256, 8), f32).at[:, 0:4].set(p["w3"])
    w3e = jnp.zeros((256, 8), f32).at[:, 4:6].set(p["ew3"])
    b3 = jnp.zeros((1, 8), f32).at[:, 0:4].set(p["b3"]).at[:, 4:6].set(p["eb3"])
    return {"w1a": w1a, "w2": w2, "ew2": ew2, "b2": p["b2"], "eb2": p["eb2"],
            "w3v": w3v, "w3e": w3e, "b3": b3}


def _goal_dqn_forward_impl(state, goal, fused, *, tb=128):
    """state: (B,4)  goal: (B,2)  -> (val_x: (B,4), est_x: (B,2))"""
    state = state.reshape(-1, 4).astype(jnp.float32)
    goal = goal.reshape(-1, 2).astype(jnp.float32)
    B = state.shape[0]

    # x = [state | goal | 1 | 0]; ones column carries the folded layer-1 bias.
    x = jnp.concatenate(
        [state, goal,
         jnp.ones((B, 1), jnp.float32), jnp.zeros((B, 1), jnp.float32)],
        axis=1)                                                     # (B, 8)

    n_tiles = pl.cdiv(B, tb)
    bp = n_tiles * tb
    if bp != B:
        x = jnp.pad(x, ((0, bp - B), (0, 0)))

    const = lambda i: (0, 0)   # weights: same block every step -> DMA'd once

    out = pl.pallas_call(
        goal_dqn_kernel,
        out_shape=jax.ShapeDtypeStruct((bp, 8), jnp.float32),
        grid_spec=pltpu.PrefetchScalarGridSpec(
            num_scalar_prefetch=0,
            grid=(n_tiles,),
            in_specs=[
                pl.BlockSpec((tb, 8), lambda i: (i, 0)),    # x tile
                pl.BlockSpec((8, 512), const),              # fused layer-1 (+bias)
                pl.BlockSpec((256, 256), const),            # w2  (bf16, resident)
                pl.BlockSpec((256, 256), const),            # ew2 (bf16, resident)
                pl.BlockSpec((1, 256), const),              # b2
                pl.BlockSpec((1, 256), const),              # eb2
                pl.BlockSpec((256, 8), const),              # w3 -> cols 0:4
                pl.BlockSpec((256, 8), const),              # ew3 -> cols 4:6
                pl.BlockSpec((1, 8), const),                # [b3 | eb3 | 0]
            ],
            out_specs=pl.BlockSpec((tb, 8), lambda i: (i, 0)),
        ),
        compiler_params=pltpu.CompilerParams(
            dimension_semantics=("parallel",)),
    )(x, fused["w1a"], fused["w2"], fused["ew2"], fused["b2"], fused["eb2"],
      fused["w3v"], fused["w3e"], fused["b3"])

    val_x = out[:B, 0:4]
    est_x = out[:B, 4:6]
    return val_x, est_x


goal_dqn_forward = jax.jit(_goal_dqn_forward_impl, static_argnames=("tb",))


def _linear_params(key, fan_in, fan_out):
    """Deterministic init matching nn.Linear bounds (uniform +- 1/sqrt(fan_in)).
    Weight returned pre-transposed to (fan_in, fan_out)."""
    kw, kb = jax.random.split(key)
    bound = 1.0 / jnp.sqrt(jnp.float32(fan_in))
    w = jax.random.uniform(kw, (fan_in, fan_out), jnp.float32, -bound, bound)
    b = jax.random.uniform(kb, (1, fan_out), jnp.float32, -bound, bound)
    return w, b


def init_params(key):
    keys = jax.random.split(key, 6)
    p = {}
    p["w1"], p["b1"] = _linear_params(keys[0], 6, 256)
    p["w2"], p["b2"] = _linear_params(keys[1], 256, 256)
    p["w3"], p["b3"] = _linear_params(keys[2], 256, 4)
    p["ew1"], p["eb1"] = _linear_params(keys[3], 6, 256)
    p["ew2"], p["eb2"] = _linear_params(keys[4], 256, 256)
    p["ew3"], p["eb3"] = _linear_params(keys[5], 256, 2)
    return p


def _reference_forward(state, goal, p, *, bf16_layer2=False):
    x = jnp.concatenate([state.reshape(-1, 4), goal.reshape(-1, 2)], axis=1)

    def layer2(a, w):
        if bf16_layer2:
            return jnp.dot(a.astype(jnp.bfloat16), w.astype(jnp.bfloat16),
                           preferred_element_type=jnp.float32)
        return a @ w

    h = jnp.maximum(x @ p["w1"] + p["b1"], 0.0)
    h = jnp.maximum(layer2(h, p["w2"]) + p["b2"], 0.0)
    val = h @ p["w3"] + p["b3"]
    g = jnp.maximum(x @ p["ew1"] + p["eb1"], 0.0)
    g = jnp.maximum(layer2(g, p["ew2"]) + p["eb2"], 0.0)
    z = g @ p["ew3"] + p["eb3"]
    est = jax.nn.log_softmax(z, axis=1)
    return val, est


if __name__ == "__main__":
    key = jax.random.PRNGKey(0)
    kp, ks, kg = jax.random.split(key, 3)

    B = 2
    params = init_params(kp)
    fused = fuse_params(params)
    state = jax.random.normal(ks, (B, 4), jnp.float32)
    goal = jax.random.normal(kg, (B, 2), jnp.float32)

    val_x, est_x = goal_dqn_forward(state, goal, fused)
    val_x, est_x = jax.block_until_ready((val_x, est_x))

    assert val_x.shape == (B, 4) and est_x.shape == (B, 2)

    # Tight check against a reference applying the same bf16 rounding on the
    # 256x256 layers (identical math to the kernel).
    val_rb, est_rb = _reference_forward(state, goal, params, bf16_layer2=True)
    assert jnp.allclose(val_x, val_rb, atol=2e-3, rtol=2e-3)
    assert jnp.allclose(est_x, est_rb, atol=2e-3, rtol=2e-3)

    # Looser check against the full-f32 PyTorch-equivalent reference (bf16
    # matmul rounding on the 256x256 layers is the only deviation).
    val_rf, est_rf = _reference_forward(state, goal, params, bf16_layer2=False)
    assert jnp.allclose(val_x, val_rf, atol=5e-2, rtol=5e-2)
    assert jnp.allclose(est_x, est_rf, atol=5e-2, rtol=5e-2)

    print("KERNEL_OK")
</pallas_src>

<mosaic_0001>
module attributes {stable_mosaic.version = 11 : i64} {
  func.func @goal_dqn_kernel(%arg0: i32, %arg1: memref<128x8xf32, #tpu.memory_space<vmem>>, %arg2: memref<8x512xf32, #tpu.memory_space<vmem>>, %arg3: memref<256x256xbf16, #tpu.memory_space<vmem>>, %arg4: memref<256x256xbf16, #tpu.memory_space<vmem>>, %arg5: memref<1x256xf32, #tpu.memory_space<vmem>>, %arg6: memref<1x256xf32, #tpu.memory_space<vmem>>, %arg7: memref<256x8xf32, #tpu.memory_space<vmem>>, %arg8: memref<256x8xf32, #tpu.memory_space<vmem>>, %arg9: memref<1x8xf32, #tpu.memory_space<vmem>>, %arg10: memref<128x8xf32, #tpu.memory_space<vmem>>) attributes {dimension_semantics = [#tpu.dimension_semantics<parallel>], iteration_bounds = array<i64: 1>, scalar_prefetch = 0 : i64, scratch_operands = 0 : i64, tpu.core_type = #tpu.core_type<tc>, window_params = [{transform_indices = @transform_0, window_bounds = array<i64: 128, 8>}, {pipeline_mode = #tpu.pipeline_mode<synchronous>, transform_indices = @transform_1, window_bounds = array<i64: 8, 512>}, {pipeline_mode = #tpu.pipeline_mode<synchronous>, transform_indices = @transform_2, window_bounds = array<i64: 256, 256>}, {pipeline_mode = #tpu.pipeline_mode<synchronous>, transform_indices = @transform_3, window_bounds = array<i64: 256, 256>}, {pipeline_mode = #tpu.pipeline_mode<synchronous>, transform_indices = @transform_4, window_bounds = array<i64: 1, 256>}, {pipeline_mode = #tpu.pipeline_mode<synchronous>, transform_indices = @transform_5, window_bounds = array<i64: 1, 256>}, {pipeline_mode = #tpu.pipeline_mode<synchronous>, transform_indices = @transform_6, window_bounds = array<i64: 256, 8>}, {pipeline_mode = #tpu.pipeline_mode<synchronous>, transform_indices = @transform_7, window_bounds = array<i64: 256, 8>}, {pipeline_mode = #tpu.pipeline_mode<synchronous>, transform_indices = @transform_8, window_bounds = array<i64: 1, 8>}, {transform_indices = @transform_9, window_bounds = array<i64: 128, 8>}]} {
    %c0 = arith.constant 0 : index
    %c0_0 = arith.constant 0 : index
    %0 = vector.load %arg1[%c0, %c0_0] : memref<128x8xf32, #tpu.memory_space<vmem>>, vector<128x8xf32>
    %c0_1 = arith.constant 0 : index
    %c0_2 = arith.constant 0 : index
    %1 = vector.load %arg2[%c0_1, %c0_2] : memref<8x512xf32, #tpu.memory_space<vmem>>, vector<8x512xf32>
    %cst = arith.constant dense<0.000000e+00> : vector<128x512xf32>
    %2 = tpu.matmul %0, %1, %cst {dimension_numbers = #tpu.dot_dimension_numbers<[1], [0], [0], [1], [0, 0, 1, 1], [], []>} : vector<128x8xf32>, vector<8x512xf32>, vector<128x512xf32> -> vector<128x512xf32>
    %cst_3 = arith.constant 0.000000e+00 : f32
    %3 = vector.broadcast %cst_3 : f32 to vector<128x512xf32>
    %4 = arith.maximumf %2, %3 : vector<128x512xf32>
    %5 = vector.extract_strided_slice %4 {offsets = [0, 0], sizes = [128, 256], strides = [1, 1]} : vector<128x512xf32> to vector<128x256xf32>
    %6 = vector.extract_strided_slice %4 {offsets = [0, 256], sizes = [128, 256], strides = [1, 1]} : vector<128x512xf32> to vector<128x256xf32>
    %7 = arith.truncf %5 : vector<128x256xf32> to vector<128x256xbf16>
    %c0_4 = arith.constant 0 : index
    %c0_5 = arith.constant 0 : index
    %8 = vector.load %arg3[%c0_4, %c0_5] : memref<256x256xbf16, #tpu.memory_space<vmem>>, vector<256x256xbf16>
    %cst_6 = arith.constant dense<0.000000e+00> : vector<128x256xf32>
    %9 = tpu.matmul %7, %8, %cst_6 {dimension_numbers = #tpu.dot_dimension_numbers<[1], [0], [0], [1], [0, 0, 1, 1], [], []>} : vector<128x256xbf16>, vector<256x256xbf16>, vector<128x256xf32> -> vector<128x256xf32>
    %c0_7 = arith.constant 0 : index
    %c0_8 = arith.constant 0 : index
    %10 = vector.load %arg5[%c0_7, %c0_8] : memref<1x256xf32, #tpu.memory_space<vmem>>, vector<1x256xf32>
    %11 = vector.broadcast %10 : vector<1x256xf32> to vector<128x256xf32>
    %12 = arith.addf %9, %11 : vector<128x256xf32>
    %13 = arith.truncf %6 : vector<128x256xf32> to vector<128x256xbf16>
    %c0_9 = arith.constant 0 : index
    %c0_10 = arith.constant 0 : index
    %14 = vector.load %arg4[%c0_9, %c0_10] : memref<256x256xbf16, #tpu.memory_space<vmem>>, vector<256x256xbf16>
    %cst_11 = arith.constant dense<0.000000e+00> : vector<128x256xf32>
    %15 = tpu.matmul %13, %14, %cst_11 {dimension_numbers = #tpu.dot_dimension_numbers<[1], [0], [0], [1], [0, 0, 1, 1], [], []>} : vector<128x256xbf16>, vector<256x256xbf16>, vector<128x256xf32> -> vector<128x256xf32>
    %c0_12 = arith.constant 0 : index
    %c0_13 = arith.constant 0 : index
    %16 = vector.load %arg6[%c0_12, %c0_13] : memref<1x256xf32, #tpu.memory_space<vmem>>, vector<1x256xf32>
    %17 = vector.broadcast %16 : vector<1x256xf32> to vector<128x256xf32>
    %18 = arith.addf %15, %17 : vector<128x256xf32>
    %cst_14 = arith.constant 0.000000e+00 : f32
    %19 = vector.broadcast %cst_14 : f32 to vector<128x256xf32>
    %20 = arith.maximumf %12, %19 : vector<128x256xf32>
    %cst_15 = arith.constant 0.000000e+00 : f32
    %21 = vector.broadcast %cst_15 : f32 to vector<128x256xf32>
    %22 = arith.maximumf %18, %21 : vector<128x256xf32>
    %c0_16 = arith.constant 0 : index
    %c0_17 = arith.constant 0 : index
    %23 = vector.load %arg7[%c0_16, %c0_17] : memref<256x8xf32, #tpu.memory_space<vmem>>, vector<256x8xf32>
    %cst_18 = arith.constant dense<0.000000e+00> : vector<128x8xf32>
    %24 = tpu.matmul %20, %23, %cst_18 {dimension_numbers = #tpu.dot_dimension_numbers<[1], [0], [0], [1], [0, 0, 1, 1], [], []>} : vector<128x256xf32>, vector<256x8xf32>, vector<128x8xf32> -> vector<128x8xf32>
    %c0_19 = arith.constant 0 : index
    %c0_20 = arith.constant 0 : index
    %25 = vector.load %arg8[%c0_19, %c0_20] : memref<256x8xf32, #tpu.memory_space<vmem>>, vector<256x8xf32>
    %cst_21 = arith.constant dense<0.000000e+00> : vector<128x8xf32>
    %26 = tpu.matmul %22, %25, %cst_21 {dimension_numbers = #tpu.dot_dimension_numbers<[1], [0], [0], [1], [0, 0, 1, 1], [], []>} : vector<128x256xf32>, vector<256x8xf32>, vector<128x8xf32> -> vector<128x8xf32>
    %27 = arith.addf %24, %26 : vector<128x8xf32>
    %c0_22 = arith.constant 0 : index
    %c0_23 = arith.constant 0 : index
    %28 = vector.load %arg9[%c0_22, %c0_23] : memref<1x8xf32, #tpu.memory_space<vmem>>, vector<1x8xf32>
    %29 = vector.broadcast %28 : vector<1x8xf32> to vector<128x8xf32>
    %30 = arith.addf %27, %29 : vector<128x8xf32>
    %31 = vector.extract_strided_slice %30 {offsets = [0, 4], sizes = [128, 1], strides = [1, 1]} : vector<128x8xf32> to vector<128x1xf32>
    %32 = vector.extract_strided_slice %30 {offsets = [0, 5], sizes = [128, 1], strides = [1, 1]} : vector<128x8xf32> to vector<128x1xf32>
    %33 = arith.maximumf %31, %32 : vector<128x1xf32>
    %34 = arith.subf %31, %33 : vector<128x1xf32>
    %35 = math.exp %34 : vector<128x1xf32>
    %36 = arith.subf %32, %33 : vector<128x1xf32>
    %37 = math.exp %36 : vector<128x1xf32>
    %38 = arith.addf %35, %37 : vector<128x1xf32>
    %39 = math.log %38 : vector<128x1xf32>
    %40 = arith.addf %33, %39 : vector<128x1xf32>
    %41 = tpu.iota {dimensions = array<i32: 1>} : vector<128x8xi32>
    %c4_i32 = arith.constant 4 : i32
    %42 = vector.broadcast %c4_i32 : i32 to vector<128x8xi32>
    %43 = arith.cmpi sge, %41, %42 : vector<128x8xi32>
    %c6_i32 = arith.constant 6 : i32
    %44 = vector.broadcast %c6_i32 : i32 to vector<128x8xi32>
    %45 = arith.cmpi slt, %41, %44 : vector<128x8xi32>
    %46 = arith.andi %43, %45 : vector<128x8xi1>
    %47 = vector.broadcast %40 : vector<128x1xf32> to vector<128x8xf32>
    %48 = arith.subf %30, %47 : vector<128x8xf32>
    %49 = arith.select %46, %48, %30 : vector<128x8xi1>, vector<128x8xf32>
    %c0_24 = arith.constant 0 : index
    %c0_25 = arith.constant 0 : index
    %50 = vector.load %arg10[%c0_24, %c0_25] : memref<128x8xf32, #tpu.memory_space<vmem>>, vector<128x8xf32>
    tpu.vector_store %arg10[%c0_24, %c0_25], %49 {strides = array<i32>} : memref<128x8xf32, #tpu.memory_space<vmem>>, vector<128x8xf32>,
    return
  }
  func.func @transform_0(%arg0: i32) -> (i32, i32) {
    %c0_i32 = arith.constant 0 : i32
    %c0_i32_0 = arith.constant 0 : i32
    return %arg0, %c0_i32 : i32, i32
  }
  func.func @transform_1(%arg0: i32) -> (i32, i32) {
    %c0_i32 = arith.constant 0 : i32
    %c0_i32_0 = arith.constant 0 : i32
    %c0_i32_1 = arith.constant 0 : i32
    return %c0_i32, %c0_i32_0 : i32, i32
  }
  func.func @transform_2(%arg0: i32) -> (i32, i32) {
    %c0_i32 = arith.constant 0 : i32
    %c0_i32_0 = arith.constant 0 : i32
    %c0_i32_1 = arith.constant 0 : i32
    return %c0_i32, %c0_i32_0 : i32, i32
  }
  func.func @transform_3(%arg0: i32) -> (i32, i32) {
    %c0_i32 = arith.constant 0 : i32
    %c0_i32_0 = arith.constant 0 : i32
    %c0_i32_1 = arith.constant 0 : i32
    return %c0_i32, %c0_i32_0 : i32, i32
  }
  func.func @transform_4(%arg0: i32) -> (i32, i32) {
    %c0_i32 = arith.constant 0 : i32
    %c0_i32_0 = arith.constant 0 : i32
    %c0_i32_1 = arith.constant 0 : i32
    return %c0_i32, %c0_i32_0 : i32, i32
  }
  func.func @transform_5(%arg0: i32) -> (i32, i32) {
    %c0_i32 = arith.constant 0 : i32
    %c0_i32_0 = arith.constant 0 : i32
    %c0_i32_1 = arith.constant 0 : i32
    return %c0_i32, %c0_i32_0 : i32, i32
  }
  func.func @transform_6(%arg0: i32) -> (i32, i32) {
    %c0_i32 = arith.constant 0 : i32
    %c0_i32_0 = arith.constant 0 : i32
    %c0_i32_1 = arith.constant 0 : i32
    return %c0_i32, %c0_i32_0 : i32, i32
  }
  func.func @transform_7(%arg0: i32) -> (i32, i32) {
    %c0_i32 = arith.constant 0 : i32
    %c0_i32_0 = arith.constant 0 : i32
    %c0_i32_1 = arith.constant 0 : i32
    return %c0_i32, %c0_i32_0 : i32, i32
  }
  func.func @transform_8(%arg0: i32) -> (i32, i32) {
    %c0_i32 = arith.constant 0 : i32
    %c0_i32_0 = arith.constant 0 : i32
    %c0_i32_1 = arith.constant 0 : i32
    return %c0_i32, %c0_i32_0 : i32, i32
  }
  func.func @transform_9(%arg0: i32) -> (i32, i32) {
    %c0_i32 = arith.constant 0 : i32
    %c0_i32_0 = arith.constant 0 : i32
    return %arg0, %c0_i32 : i32, i32
  }
}

</mosaic_0001>

<llo_original>
// kernel: _goal_dqn_forward_impl.1
$region0: #{_goal_dqn_forward_impl.1}
  #allocation0 [shape = 'u32[]', space=smem, size = 0x4, offset = 0x4, fixed_abs, tag = 'smem constant byte address 0x4 - core index']
  #allocation1 [shape = 'u32[144,128]{1,0:T(1,128)}', space=vmem, size = 0x12000, scoped, tag = 'internal scratch']
  %s0 = inlined_call_operand.vmem [shape: f32[128,8], index: 0, kind: input, shape index: {}]
  %s1 = inlined_call_operand.vmem [shape: f32[8,512], index: 1, kind: input, shape index: {}]
  %s2 = inlined_call_operand.vmem [shape: bf16[256,256], index: 2, kind: input, shape index: {}]
  %s3 = inlined_call_operand.vmem [shape: bf16[256,256], index: 3, kind: input, shape index: {}]
  %s4 = inlined_call_operand.vmem [shape: f32[1,256], index: 4, kind: input, shape index: {}]
  %s5 = inlined_call_operand.vmem [shape: f32[1,256], index: 5, kind: input, shape index: {}]
  %s6 = inlined_call_operand.vmem [shape: f32[256,8], index: 6, kind: input, shape index: {}]
  %s7 = inlined_call_operand.vmem [shape: f32[256,8], index: 7, kind: input, shape index: {}]
  %s8 = inlined_call_operand.vmem [shape: f32[1,8], index: 8, kind: input, shape index: {}]
  %s9 = inlined_call_operand.vmem [shape: f32[128,8], index: 9, kind: output, shape index: {}]
  %s10 = sld [smem:[#allocation0]]
  $region46: #{_goal_dqn_forward_impl.1} parent=0
    _
  %s12 = ssub.s32 1, %s10
  %s13 = scalar_select 0, %s12, %s10
  // Predicated region
  $region2: #{_goal_dqn_forward_impl.1} parent=0 // pred_check
    _
  $region3: #{_goal_dqn_forward_impl.1} parent=0 // pred_check_branch
    %15 = sbr.rel (0) target = $region5
  $region4: #{_goal_dqn_forward_impl.1} parent=0 // pred_region
    _
  $region5: #{_goal_dqn_forward_impl.1} parent=0 // pred_fallthru
    _
  // Predicated region
  $region6: #{_goal_dqn_forward_impl.1} parent=0 // pred_check
    _
  $region7: #{_goal_dqn_forward_impl.1} parent=0 // pred_check_branch
    %17 = sbr.rel (0) target = $region9
  $region8: #{_goal_dqn_forward_impl.1} parent=0 // pred_region
    _
  $region9: #{_goal_dqn_forward_impl.1} parent=0 // pred_fallthru
    _
  // Predicated region
  $region10: #{_goal_dqn_forward_impl.1} parent=0 // pred_check
    _
  $region11: #{_goal_dqn_forward_impl.1} parent=0 // pred_check_branch
    %19 = sbr.rel (0) target = $region13
  $region12: #{_goal_dqn_forward_impl.1} parent=0 // pred_region
    _
  $region13: #{_goal_dqn_forward_impl.1} parent=0 // pred_fallthru
    _
  // Predicated region
  $region14: #{_goal_dqn_forward_impl.1} parent=0 // pred_check
    _
  $region15: #{_goal_dqn_forward_impl.1} parent=0 // pred_check_branch
    %21 = sbr.rel (0) target = $region17
  $region16: #{_goal_dqn_forward_impl.1} parent=0 // pred_region
    _
  $region17: #{_goal_dqn_forward_impl.1} parent=0 // pred_fallthru
    _
  // Predicated region
  $region18: #{_goal_dqn_forward_impl.1} parent=0 // pred_check
    _
  $region19: #{_goal_dqn_forward_impl.1} parent=0 // pred_check_branch
    %23 = sbr.rel (0) target = $region21
  $region20: #{_goal_dqn_forward_impl.1} parent=0 // pred_region
    _
  $region21: #{_goal_dqn_forward_impl.1} parent=0 // pred_fallthru
    _
  // Predicated region
  $region22: #{_goal_dqn_forward_impl.1} parent=0 // pred_check
    _
  $region23: #{_goal_dqn_forward_impl.1} parent=0 // pred_check_branch
    %25 = sbr.rel (0) target = $region25
  $region24: #{_goal_dqn_forward_impl.1} parent=0 // pred_region
    _
  $region25: #{_goal_dqn_forward_impl.1} parent=0 // pred_fallthru
    _
  // Predicated region
  $region26: #{_goal_dqn_forward_impl.1} parent=0 // pred_check
    _
  $region27: #{_goal_dqn_forward_impl.1} parent=0 // pred_check_branch
    %27 = sbr.rel (0) target = $region29
  $region28: #{_goal_dqn_forward_impl.1} parent=0 // pred_region
    _
  $region29: #{_goal_dqn_forward_impl.1} parent=0 // pred_fallthru
    _
  // Predicated region
  $region30: #{_goal_dqn_forward_impl.1} parent=0 // pred_check
    _
  $region31: #{_goal_dqn_forward_impl.1} parent=0 // pred_check_branch
    %29 = sbr.rel (0) target = $region33
  $region32: #{_goal_dqn_forward_impl.1} parent=0 // pred_region
    _
  $region33: #{_goal_dqn_forward_impl.1} parent=0 // pred_fallthru
    _
  // Predicated region
  $region34: #{_goal_dqn_forward_impl.1} parent=0 // pred_check
    _
  $region35: #{_goal_dqn_forward_impl.1} parent=0 // pred_check_branch
    %31 = sbr.rel (0) target = $region37
  $region36: #{_goal_dqn_forward_impl.1} parent=0 // pred_region
    _
  $region37: #{_goal_dqn_forward_impl.1} parent=0 // pred_fallthru
    _
  %v32 = vld [vmem:[%s0] sm:$0xff]
  %v33 = vld [vmem:[%s0 + $0x8] sm:$0xff]
  %v34 = vld [vmem:[%s0 + $0x10] sm:$0xff]
  %v35 = vld [vmem:[%s0 + $0x18] sm:$0xff]
  %v36 = vld [vmem:[%s0 + $0x20] sm:$0xff]
  %v37 = vld [vmem:[%s0 + $0x28] sm:$0xff]
  %v38 = vld [vmem:[%s0 + $0x30] sm:$0xff]
  %v39 = vld [vmem:[%s0 + $0x38] sm:$0xff]
  %v40 = vld [vmem:[%s0 + $0x40] sm:$0xff]
  %v41 = vld [vmem:[%s0 + $0x48] sm:$0xff]
  %v42 = vld [vmem:[%s0 + $0x50] sm:$0xff]
  %v43 = vld [vmem:[%s0 + $0x58] sm:$0xff]
  %v44 = vld [vmem:[%s0 + $0x60] sm:$0xff]
  %v45 = vld [vmem:[%s0 + $0x68] sm:$0xff]
  %v46 = vld [vmem:[%s0 + $0x70] sm:$0xff]
  %v47 = vld [vmem:[%s0 + $0x78] sm:$0xff]
  %v48 = vld [vmem:[%s1] sm:$0xff]
  %v49 = vld [vmem:[%s1 + $0x8] sm:$0xff]
  %v50 = vld [vmem:[%s1 + $0x10] sm:$0xff]
  %v51 = vld [vmem:[%s1 + $0x18] sm:$0xff]
  %vm52 = vcmask 64512
  %v54 = vsel %vm52, %v32, 0
  %v57 = vsel %vm52, %v33, 0
  %v60 = vsel %vm52, %v34, 0
  %v63 = vsel %vm52, %v35, 0
  %v66 = vsel %vm52, %v36, 0
  %v69 = vsel %vm52, %v37, 0
  %v72 = vsel %vm52, %v38, 0
  %v75 = vsel %vm52, %v39, 0
  %v78 = vsel %vm52, %v40, 0
  %v81 = vsel %vm52, %v41, 0
  %v84 = vsel %vm52, %v42, 0
  %v87 = vsel %vm52, %v43, 0
  %v90 = vsel %vm52, %v44, 0
  %v93 = vsel %vm52, %v45, 0
  %v96 = vsel %vm52, %v46, 0
  %v99 = vsel %vm52, %v47, 0
  %101 = vmatprep.subr.mxu0 %v49
  %102 = vmatpush1.msra.mxu0 %v48
  %103 = vmatprep.subr.mxu0 0.0
  %104 = vmatpush1.msra.mxu0 0.0
  %105 = vmatprep.subr.mxu0 0.0
  %106 = vmatpush1.msra.mxu0 0.0
  %107 = vmatprep.subr.mxu0 0.0
  %108 = vmatpush1.msra.mxu0 0.0
  %109 = vmatprep.subr.mxu0 0.0
  %110 = vmatpush1.msra.mxu0 0.0
  %111 = vmatprep.subr.mxu0 0.0
  %112 = vmatpush1.msra.mxu0 0.0
  %113 = vmatprep.subr.mxu0 0.0
  %114 = vmatpush1.msra.mxu0 0.0
  %115 = vmatprep.subr.mxu0 0.0
  %116 = vmatpush1.msra.mxu0 0.0
  %117 = vmatprep.subr.mxu0 0.0
  %118 = vmatpush1.msra.mxu0 0.0
  %119 = vmatprep.subr.mxu0 0.0
  %120 = vmatpush1.msra.mxu0 0.0
  %121 = vmatprep.subr.mxu0 0.0
  %122 = vmatpush1.msra.mxu0 0.0
  %123 = vmatprep.subr.mxu0 0.0
  %124 = vmatpush1.msra.mxu0 0.0
  %125 = vmatprep.subr.mxu0 0.0
  %126 = vmatpush1.msra.mxu0 0.0
  %127 = vmatprep.subr.mxu0 0.0
  %128 = vmatpush1.msra.mxu0 0.0
  %129 = vmatprep.subr.mxu0 0.0
  %130 = vmatpush1.msra.mxu0 0.0
  %131 = vmatprep.subr.mxu0 0.0
  %132 = vmatpush1.msra.mxu0 0.0
  %133 = vmatprep.subr.mxu0 0.0
  %134 = vmatpush1.msra.mxu0 0.0
  %135 = vmatprep.subr.mxu0 0.0
  %136 = vmatpush1.msra.mxu0 0.0
  %137 = vmatprep.subr.mxu0 0.0
  %138 = vmatpush1.msra.mxu0 0.0
  %139 = vmatprep.subr.mxu0 0.0
  %140 = vmatpush1.msra.mxu0 0.0
  %141 = vmatprep.subr.mxu0 0.0
  %142 = vmatpush1.msra.mxu0 0.0
  %143 = vmatprep.subr.mxu0 0.0
  %144 = vmatpush1.msra.mxu0 0.0
  %145 = vmatprep.subr.mxu0 0.0
  %146 = vmatpush1.msra.mxu0 0.0
  %147 = vmatprep.subr.mxu0 0.0
  %148 = vmatpush1.msra.mxu0 0.0
  %149 = vmatprep.subr.mxu0 0.0
  %150 = vmatpush1.msra.mxu0 0.0
  %151 = vmatprep.subr.mxu0 0.0
  %152 = vmatpush1.msra.mxu0 0.0
  %153 = vmatprep.subr.mxu0 0.0
  %154 = vmatpush1.msra.mxu0 0.0
  %155 = vmatprep.subr.mxu0 0.0
  %156 = vmatpush1.msra.mxu0 0.0
  %157 = vmatprep.subr.mxu0 0.0
  %158 = vmatpush1.msra.mxu0 0.0
  %159 = vmatprep.subr.mxu0 0.0
  %160 = vmatpush1.msra.mxu0 0.0
  %161 = vmatprep.subr.mxu0 0.0
  %162 = vmatpush1.msra.mxu0 0.0
  %163 = vmatprep.subr.mxu0 0.0
  %164 = vmatpush1.msra.mxu0 0.0
  %165 = vmatprep.mubr.f32.mxu0 0.0
  %166 = vmatmul.mubr.f32.gmra.mrb[0].mxu0 %v54
  %v167 = vpop.f32.mrb[0].mxu0
  %v168 = vadd.f32 0.0, %v167
  %v169 = vpop.f32.mrb[0].mxu0
  %v170 = vadd.f32 0.0, %v169
  %171 = vmatprep.mubr.f32.mxu0 0.0
  %172 = vmatmul.mubr.f32.gmra.mrb[0].mxu0 %v57
  %v173 = vpop.f32.mrb[0].mxu0
  %v174 = vadd.f32 0.0, %v173
  %v175 = vpop.f32.mrb[0].mxu0
  %v176 = vadd.f32 0.0, %v175
  %177 = vmatprep.mubr.f32.mxu0 0.0
  %178 = vmatmul.mubr.f32.gmra.mrb[0].mxu0 %v60
  %v179 = vpop.f32.mrb[0].mxu0
  %v180 = vadd.f32 0.0, %v179
  %v181 = vpop.f32.mrb[0].mxu0
  %v182 = vadd.f32 0.0, %v181
  %183 = vmatprep.mubr.f32.mxu0 0.0
  %184 = vmatmul.mubr.f32.gmra.mrb[0].mxu0 %v63
  %v185 = vpop.f32.mrb[0].mxu0
  %v186 = vadd.f32 0.0, %v185
  %v187 = vpop.f32.mrb[0].mxu0
  %v188 = vadd.f32 0.0, %v187
  %189 = vmatprep.mubr.f32.mxu0 0.0
  %190 = vmatmul.mubr.f32.gmra.mrb[0].mxu0 %v66
  %v191 = vpop.f32.mrb[0].mxu0
  %v192 = vadd.f32 0.0, %v191
  %v193 = vpop.f32.mrb[0].mxu0
  %v194 = vadd.f32 0.0, %v193
  %195 = vmatprep.mubr.f32.mxu0 0.0
  %196 = vmatmul.mubr.f32.gmra.mrb[0].mxu0 %v69
  %v197 = vpop.f32.mrb[0].mxu0
  %v198 = vadd.f32 0.0, %v197
  %v199 = vpop.f32.mrb[0].mxu0
  %v200 = vadd.f32 0.0, %v199
  %201 = vmatprep.mubr.f32.mxu0 0.0
  %202 = vmatmul.mubr.f32.gmra.mrb[0].mxu0 %v72
  %v203 = vpop.f32.mrb[0].mxu0
  %v204 = vadd.f32 0.0, %v203
  %v205 = vpop.f32.mrb[0].mxu0
  %v206 = vadd.f32 0.0, %v205
  %207 = vmatprep.mubr.f32.mxu0 0.0
  %208 = vmatmul.mubr.f32.gmra.mrb[0].mxu0 %v75
  %v209 = vpop.f32.mrb[0].mxu0
  %v210 = vadd.f32 0.0, %v209
  %v211 = vpop.f32.mrb[0].mxu0
  %v212 = vadd.f32 0.0, %v211
  %213 = vmatprep.mubr.f32.mxu0 0.0
  %214 = vmatmul.mubr.f32.gmra.mrb[0].mxu0 %v78
  %v215 = vpop.f32.mrb[0].mxu0
  %v216 = vadd.f32 0.0, %v215
  %v217 = vpop.f32.mrb[0].mxu0
  %v218 = vadd.f32 0.0, %v217
  %219 = vmatprep.mubr.f32.mxu0 0.0
  %220 = vmatmul.mubr.f32.gmra.mrb[0].mxu0 %v81
  %v221 = vpop.f32.mrb[0].mxu0
  %v222 = vadd.f32 0.0, %v221
  %v223 = vpop.f32.mrb[0].mxu0
  %v224 = vadd.f32 0.0, %v223
  %225 = vmatprep.mubr.f32.mxu0 0.0
  %226 = vmatmul.mubr.f32.gmra.mrb[0].mxu0 %v84
  %v227 = vpop.f32.mrb[0].mxu0
  %v228 = vadd.f32 0.0, %v227
  %v229 = vpop.f32.mrb[0].mxu0
  %v230 = vadd.f32 0.0, %v229
  %231 = vmatprep.mubr.f32.mxu0 0.0
  %232 = vmatmul.mubr.f32.gmra.mrb[0].mxu0 %v87
  %v233 = vpop.f32.mrb[0].mxu0
  %v234 = vadd.f32 0.0, %v233
  %v235 = vpop.f32.mrb[0].mxu0
  %v236 = vadd.f32 0.0, %v235
  %237 = vmatprep.mubr.f32.mxu0 0.0
  %238 = vmatmul.mubr.f32.gmra.mrb[0].mxu0 %v90
  %v239 = vpop.f32.mrb[0].mxu0
  %v240 = vadd.f32 0.0, %v239
  %v241 = vpop.f32.mrb[0].mxu0
  %v242 = vadd.f32 0.0, %v241
  %243 = vmatprep.mubr.f32.mxu0 0.0
  %244 = vmatmul.mubr.f32.gmra.mrb[0].mxu0 %v93
  %v245 = vpop.f32.mrb[0].mxu0
  %v246 = vadd.f32 0.0, %v245
  %v247 = vpop.f32.mrb[0].mxu0
  %v248 = vadd.f32 0.0, %v247
  %249 = vmatprep.mubr.f32.mxu0 0.0
  %250 = vmatmul.mubr.f32.gmra.mrb[0].mxu0 %v96
  %v251 = vpop.f32.mrb[0].mxu0
  %v252 = vadd.f32 0.0, %v251
  %v253 = vpop.f32.mrb[0].mxu0
  %v254 = vadd.f32 0.0, %v253
  %255 = vmatprep.mubr.f32.mxu0 0.0
  %256 = vmatmul.mubr.f32.gmra.mrb[0].mxu0 %v99
  %v257 = vpop.f32.mrb[0].mxu0
  %v258 = vadd.f32 0.0, %v257
  %v259 = vpop.f32.mrb[0].mxu0
  %v260 = vadd.f32 0.0, %v259
  %261 = vdwg.mxu0
  %262 = vmatprep.subr.mxu0 %v51
  %263 = vmatpush1.msra.mxu0 %v50
  %264 = vmatprep.subr.mxu0 0.0
  %265 = vmatpush1.msra.mxu0 0.0
  %266 = vmatprep.subr.mxu0 0.0
  %267 = vmatpush1.msra.mxu0 0.0
  %268 = vmatprep.subr.mxu0 0.0
  %269 = vmatpush1.msra.mxu0 0.0
  %270 = vmatprep.subr.mxu0 0.0
  %271 = vmatpush1.msra.mxu0 0.0
  %272 = vmatprep.subr.mxu0 0.0
  %273 = vmatpush1.msra.mxu0 0.0
  %274 = vmatprep.subr.mxu0 0.0
  %275 = vmatpush1.msra.mxu0 0.0
  %276 = vmatprep.subr.mxu0 0.0
  %277 = vmatpush1.msra.mxu0 0.0
  %278 = vmatprep.subr.mxu0 0.0
  %279 = vmatpush1.msra.mxu0 0.0
  %280 = vmatprep.subr.mxu0 0.0
  %281 = vmatpush1.msra.mxu0 0.0
  %282 = vmatprep.subr.mxu0 0.0
  %283 = vmatpush1.msra.mxu0 0.0
  %284 = vmatprep.subr.mxu0 0.0
  %285 = vmatpush1.msra.mxu0 0.0
  %286 = vmatprep.subr.mxu0 0.0
  %287 = vmatpush1.msra.mxu0 0.0
  %288 = vmatprep.subr.mxu0 0.0
  %289 = vmatpush1.msra.mxu0 0.0
  %290 = vmatprep.subr.mxu0 0.0
  %291 = vmatpush1.msra.mxu0 0.0
  %292 = vmatprep.subr.mxu0 0.0
  %293 = vmatpush1.msra.mxu0 0.0
  %294 = vmatprep.subr.mxu0 0.0
  %295 = vmatpush1.msra.mxu0 0.0
  %296 = vmatprep.subr.mxu0 0.0
  %297 = vmatpush1.msra.mxu0 0.0
  %298 = vmatprep.subr.mxu0 0.0
  %299 = vmatpush1.msra.mxu0 0.0
  %300 = vmatprep.subr.mxu0 0.0
  %301 = vmatpush1.msra.mxu0 0.0
  %302 = vmatprep.subr.mxu0 0.0
  %303 = vmatpush1.msra.mxu0 0.0
  %304 = vmatprep.subr.mxu0 0.0
  %305 = vmatpush1.msra.mxu0 0.0
  %306 = vmatprep.subr.mxu0 0.0
  %307 = vmatpush1.msra.mxu0 0.0
  %308 = vmatprep.subr.mxu0 0.0
  %309 = vmatpush1.msra.mxu0 0.0
  %310 = vmatprep.subr.mxu0 0.0
  %311 = vmatpush1.msra.mxu0 0.0
  %312 = vmatprep.subr.mxu0 0.0
  %313 = vmatpush1.msra.mxu0 0.0
  %314 = vmatprep.subr.mxu0 0.0
  %315 = vmatpush1.msra.mxu0 0.0
  %316 = vmatprep.subr.mxu0 0.0
  %317 = vmatpush1.msra.mxu0 0.0
  %318 = vmatprep.subr.mxu0 0.0
  %319 = vmatpush1.msra.mxu0 0.0
  %320 = vmatprep.subr.mxu0 0.0
  %321 = vmatpush1.msra.mxu0 0.0
  %322 = vmatprep.subr.mxu0 0.0
  %323 = vmatpush1.msra.mxu0 0.0
  %324 = vmatprep.subr.mxu0 0.0
  %325 = vmatpush1.msra.mxu0 0.0
  %326 = vmatprep.mubr.f32.mxu0 0.0
  %327 = vmatmul.mubr.f32.gmra.mrb[0].mxu0 %v54
  %v328 = vpop.f32.mrb[0].mxu0
  %v329 = vadd.f32 0.0, %v328
  %v330 = vpop.f32.mrb[0].mxu0
  %v331 = vadd.f32 0.0, %v330
  %332 = vmatprep.mubr.f32.mxu0 0.0
  %333 = vmatmul.mubr.f32.gmra.mrb[0].mxu0 %v57
  %v334 = vpop.f32.mrb[0].mxu0
  %v335 = vadd.f32 0.0, %v334
  %v336 = vpop.f32.mrb[0].mxu0
  %v337 = vadd.f32 0.0, %v336
  %338 = vmatprep.mubr.f32.mxu0 0.0
  %339 = vmatmul.mubr.f32.gmra.mrb[0].mxu0 %v60
  %v340 = vpop.f32.mrb[0].mxu0
  %v341 = vadd.f32 0.0, %v340
  %v342 = vpop.f32.mrb[0].mxu0
  %v343 = vadd.f32 0.0, %v342
  %344 = vmatprep.mubr.f32.mxu0 0.0
  %345 = vmatmul.mubr.f32.gmra.mrb[0].mxu0 %v63
  %v346 = vpop.f32.mrb[0].mxu0
  %v347 = vadd.f32 0.0, %v346
  %v348 = vpop.f32.mrb[0].mxu0
  %v349 = vadd.f32 0.0, %v348
  %350 = vmatprep.mubr.f32.mxu0 0.0
  %351 = vmatmul.mubr.f32.gmra.mrb[0].mxu0 %v66
  %v352 = vpop.f32.mrb[0].mxu0
  %v353 = vadd.f32 0.0, %v352
  %v354 = vpop.f32.mrb[0].mxu0
  %v355 = vadd.f32 0.0, %v354
  %356 = vmatprep.mubr.f32.mxu0 0.0
  %357 = vmatmul.mubr.f32.gmra.mrb[0].mxu0 %v69
  %v358 = vpop.f32.mrb[0].mxu0
  %v359 = vadd.f32 0.0, %v358
  %v360 = vpop.f32.mrb[0].mxu0
  %v361 = vadd.f32 0.0, %v360
  %362 = vmatprep.mubr.f32.mxu0 0.0
  %363 = vmatmul.mubr.f32.gmra.mrb[0].mxu0 %v72
  %v364 = vpop.f32.mrb[0].mxu0
  %v365 = vadd.f32 0.0, %v364
  %v366 = vpop.f32.mrb[0].mxu0
  %v367 = vadd.f32 0.0, %v366
  %368 = vmatprep.mubr.f32.mxu0 0.0
  %369 = vmatmul.mubr.f32.gmra.mrb[0].mxu0 %v75
  %v370 = vpop.f32.mrb[0].mxu0
  %v371 = vadd.f32 0.0, %v370
  %v372 = vpop.f32.mrb[0].mxu0
  %v373 = vadd.f32 0.0, %v372
  %374 = vmatprep.mubr.f32.mxu0 0.0
  %375 = vmatmul.mubr.f32.gmra.mrb[0].mxu0 %v78
  %v376 = vpop.f32.mrb[0].mxu0
  %v377 = vadd.f32 0.0, %v376
  %v378 = vpop.f32.mrb[0].mxu0
  %v379 = vadd.f32 0.0, %v378
  %380 = vmatprep.mubr.f32.mxu0 0.0
  %381 = vmatmul.mubr.f32.gmra.mrb[0].mxu0 %v81
  %v382 = vpop.f32.mrb[0].mxu0
  %v383 = vadd.f32 0.0, %v382
  %v384 = vpop.f32.mrb[0].mxu0
  %v385 = vadd.f32 0.0, %v384
  %386 = vmatprep.mubr.f32.mxu0 0.0
  %387 = vmatmul.mubr.f32.gmra.mrb[0].mxu0 %v84
  %v388 = vpop.f32.mrb[0].mxu0
  %v389 = vadd.f32 0.0, %v388
  %v390 = vpop.f32.mrb[0].mxu0
  %v391 = vadd.f32 0.0, %v390
  %392 = vmatprep.mubr.f32.mxu0 0.0
  %393 = vmatmul.mubr.f32.gmra.mrb[0].mxu0 %v87
  %v394 = vpop.f32.mrb[0].mxu0
  %v395 = vadd.f32 0.0, %v394
  %v396 = vpop.f32.mrb[0].mxu0
  %v397 = vadd.f32 0.0, %v396
  %398 = vmatprep.mubr.f32.mxu0 0.0
  %399 = vmatmul.mubr.f32.gmra.mrb[0].mxu0 %v90
  %v400 = vpop.f32.mrb[0].mxu0
  %v401 = vadd.f32 0.0, %v400
  %v402 = vpop.f32.mrb[0].mxu0
  %v403 = vadd.f32 0.0, %v402
  %404 = vmatprep.mubr.f32.mxu0 0.0
  %405 = vmatmul.mubr.f32.gmra.mrb[0].mxu0 %v93
  %v406 = vpop.f32.mrb[0].mxu0
  %v407 = vadd.f32 0.0, %v406
  %v408 = vpop.f32.mrb[0].mxu0
  %v409 = vadd.f32 0.0, %v408
  %410 = vmatprep.mubr.f32.mxu0 0.0
  %411 = vmatmul.mubr.f32.gmra.mrb[0].mxu0 %v96
  %v412 = vpop.f32.mrb[0].mxu0
  %v413 = vadd.f32 0.0, %v412
  %v414 = vpop.f32.mrb[0].mxu0
  %v415 = vadd.f32 0.0, %v414
  %416 = vmatprep.mubr.f32.mxu0 0.0
  %417 = vmatmul.mubr.f32.gmra.mrb[0].mxu0 %v99
  %v418 = vpop.f32.mrb[0].mxu0
  %v419 = vadd.f32 0.0, %v418
  %v420 = vpop.f32.mrb[0].mxu0
  %v421 = vadd.f32 0.0, %v420
  %422 = vdwg.mxu0
  %v423 = vmax.f32 %v168, 0.0
  %v424 = vmax.f32 %v170, 0.0
  %v425 = vmax.f32 %v329, 0.0
  %v426 = vmax.f32 %v331, 0.0
  %v427 = vmax.f32 %v174, 0.0
  %v428 = vmax.f32 %v176, 0.0
  %v429 = vmax.f32 %v335, 0.0
  %v430 = vmax.f32 %v337, 0.0
  %v431 = vmax.f32 %v180, 0.0
  %v432 = vmax.f32 %v182, 0.0
  %v433 = vmax.f32 %v341, 0.0
  %v434 = vmax.f32 %v343, 0.0
  %v435 = vmax.f32 %v186, 0.0
  %v436 = vmax.f32 %v188, 0.0
  %v437 = vmax.f32 %v347, 0.0
  %v438 = vmax.f32 %v349, 0.0
  %v439 = vmax.f32 %v192, 0.0
  %v440 = vmax.f32 %v194, 0.0
  %v441 = vmax.f32 %v353, 0.0
  %v442 = vmax.f32 %v355, 0.0
  %v443 = vmax.f32 %v198, 0.0
  %v444 = vmax.f32 %v200, 0.0
  %v445 = vmax.f32 %v359, 0.0
  %v446 = vmax.f32 %v361, 0.0
  %v447 = vmax.f32 %v204, 0.0
  %v448 = vmax.f32 %v206, 0.0
  %v449 = vmax.f32 %v365, 0.0
  %v450 = vmax.f32 %v367, 0.0
  %v451 = vmax.f32 %v210, 0.0
  %v452 = vmax.f32 %v212, 0.0
  %v453 = vmax.f32 %v371, 0.0
  %v454 = vmax.f32 %v373, 0.0
  %v455 = vmax.f32 %v216, 0.0
  %v456 = vmax.f32 %v218, 0.0
  %v457 = vmax.f32 %v377, 0.0
  %v458 = vmax.f32 %v379, 0.0
  %v459 = vmax.f32 %v222, 0.0
  %v460 = vmax.f32 %v224, 0.0
  %v461 = vmax.f32 %v383, 0.0
  %v462 = vmax.f32 %v385, 0.0
  %v463 = vmax.f32 %v228, 0.0
  %v464 = vmax.f32 %v230, 0.0
  %v465 = vmax.f32 %v389, 0.0
  %v466 = vmax.f32 %v391, 0.0
  %v467 = vmax.f32 %v234, 0.0
  %v468 = vmax.f32 %v236, 0.0
  %v469 = vmax.f32 %v395, 0.0
  %v470 = vmax.f32 %v397, 0.0
  %v471 = vmax.f32 %v240, 0.0
  %v472 = vmax.f32 %v242, 0.0
  %v473 = vmax.f32 %v401, 0.0
  %v474 = vmax.f32 %v403, 0.0
  %v475 = vmax.f32 %v246, 0.0
  %v476 = vmax.f32 %v248, 0.0
  %v477 = vmax.f32 %v407, 0.0
  %v478 = vmax.f32 %v409, 0.0
  %v479 = vmax.f32 %v252, 0.0
  %v480 = vmax.f32 %v254, 0.0
  %v481 = vmax.f32 %v413, 0.0
  %v482 = vmax.f32 %v415, 0.0
  %v483 = vmax.f32 %v258, 0.0
  %v484 = vmax.f32 %v260, 0.0
  %v485 = vmax.f32 %v419, 0.0
  %v486 = vmax.f32 %v421, 0.0
  %v487 = vpack.c.bf16 %v427, %v423
  %v488 = vpack.c.bf16 %v428, %v424
  %v489 = vpack.c.bf16 %v435, %v431
  %v490 = vpack.c.bf16 %v436, %v432
  %v491 = vpack.c.bf16 %v443, %v439
  %v492 = vpack.c.bf16 %v444, %v440
  %v493 = vpack.c.bf16 %v451, %v447
  %v494 = vpack.c.bf16 %v452, %v448
  %v495 = vpack.c.bf16 %v459, %v455
  %v496 = vpack.c.bf16 %v460, %v456
  %v497 = vpack.c.bf16 %v467, %v463
  %v498 = vpack.c.bf16 %v468, %v464
  %v499 = vpack.c.bf16 %v475, %v471
  %v500 = vpack.c.bf16 %v476, %v472
  %v501 = vpack.c.bf16 %v483, %v479
  %v502 = vpack.c.bf16 %v484, %v480
  %v503 = vld [vmem:[%s2] sm:$0xff]
  %v504 = vld [vmem:[%s2 + $0x8] sm:$0xff]
  %v505 = vld [vmem:[%s2 + $0x10] sm:$0xff]
  %v506 = vld [vmem:[%s2 + $0x18] sm:$0xff]
  %v507 = vld [vmem:[%s2 + $0x20] sm:$0xff]
  %v508 = vld [vmem:[%s2 + $0x28] sm:$0xff]
  %v509 = vld [vmem:[%s2 + $0x30] sm:$0xff]
  %v510 = vld [vmem:[%s2 + $0x38] sm:$0xff]
  %v511 = vld [vmem:[%s2 + $0x40] sm:$0xff]
  %v512 = vld [vmem:[%s2 + $0x48] sm:$0xff]
  %v513 = vld [vmem:[%s2 + $0x50] sm:$0xff]
  %v514 = vld [vmem:[%s2 + $0x58] sm:$0xff]
  %v515 = vld [vmem:[%s2 + $0x60] sm:$0xff]
  %v516 = vld [vmem:[%s2 + $0x68] sm:$0xff]
  %v517 = vld [vmem:[%s2 + $0x70] sm:$0xff]
  %v518 = vld [vmem:[%s2 + $0x78] sm:$0xff]
  %v519 = vld [vmem:[%s2 + $0x80] sm:$0xff]
  %v520 = vld [vmem:[%s2 + $0x88] sm:$0xff]
  %v521 = vld [vmem:[%s2 + $0x90] sm:$0xff]
  %v522 = vld [vmem:[%s2 + $0x98] sm:$0xff]
  %v523 = vld [vmem:[%s2 + $0xa0] sm:$0xff]
  %v524 = vld [vmem:[%s2 + $0xa8] sm:$0xff]
  %v525 = vld [vmem:[%s2 + $0xb0] sm:$0xff]
  %v526 = vld [vmem:[%s2 + $0xb8] sm:$0xff]
  %v527 = vld [vmem:[%s2 + $0xc0] sm:$0xff]
  %v528 = vld [vmem:[%s2 + $0xc8] sm:$0xff]
  %v529 = vld [vmem:[%s2 + $0xd0] sm:$0xff]
  %v530 = vld [vmem:[%s2 + $0xd8] sm:$0xff]
  %v531 = vld [vmem:[%s2 + $0xe0] sm:$0xff]
  %v532 = vld [vmem:[%s2 + $0xe8] sm:$0xff]
  %v533 = vld [vmem:[%s2 + $0xf0] sm:$0xff]
  %v534 = vld [vmem:[%s2 + $0xf8] sm:$0xff]
  %v535 = vld [vmem:[%s4] sm:$0x3]
  %v537 = vlaneseq
  %v538 = vshrl.u32 %v537, 7
  %v539 = vsub.s32 0, %v538
  %v540 = vrot.slane %v535, %v539
  %v541 = vlaneseq
  %v542 = vshrl.u32 %v541, 7
  %v543 = vsub.s32 1, %v542
  %v544 = vrot.slane %v535, %v543
  %v579 = vunpack.c.l.b16 %v503
  %v580 = vunpack.c.h.b16 %v503
  %v581 = vunpack.c.l.b16 %v504
  %v582 = vunpack.c.h.b16 %v504
  %v583 = vunpack.c.l.b16 %v505
  %v584 = vunpack.c.h.b16 %v505
  %v585 = vunpack.c.l.b16 %v506
  %v586 = vunpack.c.h.b16 %v506
  %v587 = vunpack.c.l.b16 %v507
  %v588 = vunpack.c.h.b16 %v507
  %v589 = vunpack.c.l.b16 %v508
  %v590 = vunpack.c.h.b16 %v508
  %v591 = vunpack.c.l.b16 %v509
  %v592 = vunpack.c.h.b16 %v509
  %v593 = vunpack.c.l.b16 %v510
  %v594 = vunpack.c.h.b16 %v510
  %v595 = vunpack.c.l.b16 %v511
  %v596 = vunpack.c.h.b16 %v511
  %v597 = vunpack.c.l.b16 %v512
  %v598 = vunpack.c.h.b16 %v512
  %v599 = vunpack.c.l.b16 %v513
  %v600 = vunpack.c.h.b16 %v513
  %v601 = vunpack.c.l.b16 %v514
  %v602 = vunpack.c.h.b16 %v514
  %v603 = vunpack.c.l.b16 %v515
  %v604 = vunpack.c.h.b16 %v515
  %v605 = vunpack.c.l.b16 %v516
  %v606 = vunpack.c.h.b16 %v516
  %v607 = vunpack.c.l.b16 %v517
  %v608 = vunpack.c.h.b16 %v517
  %v609 = vunpack.c.l.b16 %v518
  %v610 = vunpack.c.h.b16 %v518
  %v611 = vunpack.c.l.b16 %v519
  %v612 = vunpack.c.h.b16 %v519
  %v613 = vunpack.c.l.b16 %v520
  %v614 = vunpack.c.h.b16 %v520
  %v615 = vunpack.c.l.b16 %v521
  %v616 = vunpack.c.h.b16 %v521
  %v617 = vunpack.c.l.b16 %v522
  %v618 = vunpack.c.h.b16 %v522
  %v619 = vunpack.c.l.b16 %v523
  %v620 = vunpack.c.h.b16 %v523
  %v621 = vunpack.c.l.b16 %v524
  %v622 = vunpack.c.h.b16 %v524
  %v623 = vunpack.c.l.b16 %v525
  %v624 = vunpack.c.h.b16 %v525
  %v625 = vunpack.c.l.b16 %v526
  %v626 = vunpack.c.h.b16 %v526
  %v627 = vunpack.c.l.b16 %v527
  %v628 = vunpack.c.h.b16 %v527
  %v629 = vunpack.c.l.b16 %v528
  %v630 = vunpack.c.h.b16 %v528
  %v631 = vunpack.c.l.b16 %v529
  %v632 = vunpack.c.h.b16 %v529
  %v633 = vunpack.c.l.b16 %v530
  %v634 = vunpack.c.h.b16 %v530
  %v635 = vunpack.c.l.b16 %v531
  %v636 = vunpack.c.h.b16 %v531
  %v637 = vunpack.c.l.b16 %v532
  %v638 = vunpack.c.h.b16 %v532
  %v639 = vunpack.c.l.b16 %v533
  %v640 = vunpack.c.h.b16 %v533
  %v641 = vunpack.c.l.b16 %v534
  %v642 = vunpack.c.h.b16 %v534
  %v643 = vpack.c.b16 %v581, %v579
  %v644 = vpack.c.b16 %v582, %v580
  %v645 = vpack.c.b16 %v585, %v583
  %v646 = vpack.c.b16 %v586, %v584
  %v647 = vpack.c.b16 %v589, %v587
  %v648 = vpack.c.b16 %v590, %v588
  %v649 = vpack.c.b16 %v593, %v591
  %v650 = vpack.c.b16 %v594, %v592
  %v651 = vpack.c.b16 %v597, %v595
  %v652 = vpack.c.b16 %v598, %v596
  %v653 = vpack.c.b16 %v601, %v599
  %v654 = vpack.c.b16 %v602, %v600
  %v655 = vpack.c.b16 %v605, %v603
  %v656 = vpack.c.b16 %v606, %v604
  %v657 = vpack.c.b16 %v609, %v607
  %v658 = vpack.c.b16 %v610, %v608
  %v659 = vpack.c.b16 %v613, %v611
  %v660 = vpack.c.b16 %v614, %v612
  %v661 = vpack.c.b16 %v617, %v615
  %v662 = vpack.c.b16 %v618, %v616
  %v663 = vpack.c.b16 %v621, %v619
  %v664 = vpack.c.b16 %v622, %v620
  %v665 = vpack.c.b16 %v625, %v623
  %v666 = vpack.c.b16 %v626, %v624
  %v667 = vpack.c.b16 %v629, %v627
  %v668 = vpack.c.b16 %v630, %v628
  %v669 = vpack.c.b16 %v633, %v631
  %v670 = vpack.c.b16 %v634, %v632
  %v671 = vpack.c.b16 %v637, %v635
  %v672 = vpack.c.b16 %v638, %v636
  %v673 = vpack.c.b16 %v641, %v639
  %v674 = vpack.c.b16 %v642, %v640
  %707 = vmatprep.subr.bf16.mxu0 %v644
  %708 = vmatpush1.bf16.msra.mxu0 %v643
  %709 = vmatprep.subr.bf16.mxu0 %v646
  %710 = vmatpush1.bf16.msra.mxu0 %v645
  %711 = vmatprep.subr.bf16.mxu0 %v648
  %712 = vmatpush1.bf16.msra.mxu0 %v647
  %713 = vmatprep.subr.bf16.mxu0 %v650
  %714 = vmatpush1.bf16.msra.mxu0 %v649
  %715 = vmatprep.subr.bf16.mxu0 %v652
  %716 = vmatpush1.bf16.msra.mxu0 %v651
  %717 = vmatprep.subr.bf16.mxu0 %v654
  %718 = vmatpush1.bf16.msra.mxu0 %v653
  %719 = vmatprep.subr.bf16.mxu0 %v656
  %720 = vmatpush1.bf16.msra.mxu0 %v655
  %721 = vmatprep.subr.bf16.mxu0 %v658
  %722 = vmatpush1.bf16.msra.mxu0 %v657
  %723 = vmatprep.subr.bf16.mxu0 %v660
  %724 = vmatpush1.bf16.msra.mxu0 %v659
  %725 = vmatprep.subr.bf16.mxu0 %v662
  %726 = vmatpush1.bf16.msra.mxu0 %v661
  %727 = vmatprep.subr.bf16.mxu0 %v664
  %728 = vmatpush1.bf16.msra.mxu0 %v663
  %729 = vmatprep.subr.bf16.mxu0 %v666
  %730 = vmatpush1.bf16.msra.mxu0 %v665
  %731 = vmatprep.subr.bf16.mxu0 %v668
  %732 = vmatpush1.bf16.msra.mxu0 %v667
  %733 = vmatprep.subr.bf16.mxu0 %v670
  %734 = vmatpush1.bf16.msra.mxu0 %v669
  %735 = vmatprep.subr.bf16.mxu0 %v672
  %736 = vmatpush1.bf16.msra.mxu0 %v671
  %737 = vmatprep.subr.bf16.mxu0 %v674
  %738 = vmatpush1.bf16.msra.mxu0 %v673
  %739 = vmatprep.mubr.bf16.mxu0 %v488
  %740 = vmatmul.mubr.bf16.gmra.mrb[0].mxu0 %v487
  %v741 = vpop.f32.mrb[0].mxu0
  %v742 = vadd.f32 %v540, %v741
  %v743 = vpop.f32.mrb[0].mxu0
  %v744 = vadd.f32 %v544, %v743
  %v745 = vpop.f32.mrb[0].mxu0
  %v746 = vadd.f32 %v540, %v745
  %v747 = vpop.f32.mrb[0].mxu0
  %v748 = vadd.f32 %v544, %v747
  %749 = vmatprep.mubr.bf16.mxu0 %v490
  %750 = vmatmul.mubr.bf16.gmra.mrb[0].mxu0 %v489
  %v751 = vpop.f32.mrb[0].mxu0
  %v752 = vadd.f32 %v540, %v751
  %v753 = vpop.f32.mrb[0].mxu0
  %v754 = vadd.f32 %v544, %v753
  %v755 = vpop.f32.mrb[0].mxu0
  %v756 = vadd.f32 %v540, %v755
  %v757 = vpop.f32.mrb[0].mxu0
  %v758 = vadd.f32 %v544, %v757
  %759 = vmatprep.mubr.bf16.mxu0 %v492
  %760 = vmatmul.mubr.bf16.gmra.mrb[0].mxu0 %v491
  %v761 = vpop.f32.mrb[0].mxu0
  %v762 = vadd.f32 %v540, %v761
  %v763 = vpop.f32.mrb[0].mxu0
  %v764 = vadd.f32 %v544, %v763
  %v765 = vpop.f32.mrb[0].mxu0
  %v766 = vadd.f32 %v540, %v765
  %v767 = vpop.f32.mrb[0].mxu0
  %v768 = vadd.f32 %v544, %v767
  %769 = vmatprep.mubr.bf16.mxu0 %v494
  %770 = vmatmul.mubr.bf16.gmra.mrb[0].mxu0 %v493
  %v771 = vpop.f32.mrb[0].mxu0
  %v772 = vadd.f32 %v540, %v771
  %v773 = vpop.f32.mrb[0].mxu0
  %v774 = vadd.f32 %v544, %v773
  %v775 = vpop.f32.mrb[0].mxu0
  %v776 = vadd.f32 %v540, %v775
  %v777 = vpop.f32.mrb[0].mxu0
  %v778 = vadd.f32 %v544, %v777
  %779 = vmatprep.mubr.bf16.mxu0 %v496
  %780 = vmatmul.mubr.bf16.gmra.mrb[0].mxu0 %v495
  %v781 = vpop.f32.mrb[0].mxu0
  %v782 = vadd.f32 %v540, %v781
  %v783 = vpop.f32.mrb[0].mxu0
  %v784 = vadd.f32 %v544, %v783
  %v785 = vpop.f32.mrb[0].mxu0
  %v786 = vadd.f32 %v540, %v785
  %v787 = vpop.f32.mrb[0].mxu0
  %v788 = vadd.f32 %v544, %v787
  %789 = vmatprep.mubr.bf16.mxu0 %v498
  %790 = vmatmul.mubr.bf16.gmra.mrb[0].mxu0 %v497
  %v791 = vpop.f32.mrb[0].mxu0
  %v792 = vadd.f32 %v540, %v791
  %v793 = vpop.f32.mrb[0].mxu0
  %v794 = vadd.f32 %v544, %v793
  %v795 = vpop.f32.mrb[0].mxu0
  %v796 = vadd.f32 %v540, %v795
  %v797 = vpop.f32.mrb[0].mxu0
  %v798 = vadd.f32 %v544, %v797
  %799 = vmatprep.mubr.bf16.mxu0 %v500
  %800 = vmatmul.mubr.bf16.gmra.mrb[0].mxu0 %v499
  %v801 = vpop.f32.mrb[0].mxu0
  %v802 = vadd.f32 %v540, %v801
  %v803 = vpop.f32.mrb[0].mxu0
  %v804 = vadd.f32 %v544, %v803
  %v805 = vpop.f32.mrb[0].mxu0
  %v806 = vadd.f32 %v540, %v805
  %v807 = vpop.f32.mrb[0].mxu0
  %v808 = vadd.f32 %v544, %v807
  %809 = vmatprep.mubr.bf16.mxu0 %v502
  %810 = vmatmul.mubr.bf16.gmra.mrb[0].mxu0 %v501
  %v811 = vpop.f32.mrb[0].mxu0
  %v812 = vadd.f32 %v540, %v811
  %v813 = vpop.f32.mrb[0].mxu0
  %v814 = vadd.f32 %v544, %v813
  %v815 = vpop.f32.mrb[0].mxu0
  %v816 = vadd.f32 %v540, %v815
  %v817 = vpop.f32.mrb[0].mxu0
  %v818 = vadd.f32 %v544, %v817
  %819 = vdwg.mxu0
  %v820 = vpack.c.bf16 %v429, %v425
  %v821 = vpack.c.bf16 %v430, %v426
  %v822 = vpack.c.bf16 %v437, %v433
  %v823 = vpack.c.bf16 %v438, %v434
  %v824 = vpack.c.bf16 %v445, %v441
  %v825 = vpack.c.bf16 %v446, %v442
  %v826 = vpack.c.bf16 %v453, %v449
  %v827 = vpack.c.bf16 %v454, %v450
  %v828 = vpack.c.bf16 %v461, %v457
  %v829 = vpack.c.bf16 %v462, %v458
  %v830 = vpack.c.bf16 %v469, %v465
  %v831 = vpack.c.bf16 %v470, %v466
  %v832 = vpack.c.bf16 %v477, %v473
  %v833 = vpack.c.bf16 %v478, %v474
  %v834 = vpack.c.bf16 %v485, %v481
  %v835 = vpack.c.bf16 %v486, %v482
  %v836 = vld [vmem:[%s3] sm:$0xff]
  %v837 = vld [vmem:[%s3 + $0x8] sm:$0xff]
  %v838 = vld [vmem:[%s3 + $0x10] sm:$0xff]
  %v839 = vld [vmem:[%s3 + $0x18] sm:$0xff]
  %v840 = vld [vmem:[%s3 + $0x20] sm:$0xff]
  %v841 = vld [vmem:[%s3 + $0x28] sm:$0xff]
  %v842 = vld [vmem:[%s3 + $0x30] sm:$0xff]
  %v843 = vld [vmem:[%s3 + $0x38] sm:$0xff]
  %v844 = vld [vmem:[%s3 + $0x40] sm:$0xff]
  %v845 = vld [vmem:[%s3 + $0x48] sm:$0xff]
  %v846 = vld [vmem:[%s3 + $0x50] sm:$0xff]
  %v847 = vld [vmem:[%s3 + $0x58] sm:$0xff]
  %v848 = vld [vmem:[%s3 + $0x60] sm:$0xff]
  %v849 = vld [vmem:[%s3 + $0x68] sm:$0xff]
  %v850 = vld [vmem:[%s3 + $0x70] sm:$0xff]
  %v851 = vld [vmem:[%s3 + $0x78] sm:$0xff]
  %v852 = vld [vmem:[%s3 + $0x80] sm:$0xff]
  %v853 = vld [vmem:[%s3 + $0x88] sm:$0xff]
  %v854 = vld [vmem:[%s3 + $0x90] sm:$0xff]
  %v855 = vld [vmem:[%s3 + $0x98] sm:$0xff]
  %v856 = vld [vmem:[%s3 + $0xa0] sm:$0xff]
  %v857 = vld [vmem:[%s3 + $0xa8] sm:$0xff]
  %v858 = vld [vmem:[%s3 + $0xb0] sm:$0xff]
  %v859 = vld [vmem:[%s3 + $0xb8] sm:$0xff]
  %v860 = vld [vmem:[%s3 + $0xc0] sm:$0xff]
  %v861 = vld [vmem:[%s3 + $0xc8] sm:$0xff]
  %v862 = vld [vmem:[%s3 + $0xd0] sm:$0xff]
  %v863 = vld [vmem:[%s3 + $0xd8] sm:$0xff]
  %v864 = vld [vmem:[%s3 + $0xe0] sm:$0xff]
  %v865 = vld [vmem:[%s3 + $0xe8] sm:$0xff]
  %v866 = vld [vmem:[%s3 + $0xf0] sm:$0xff]
  %v867 = vld [vmem:[%s3 + $0xf8] sm:$0xff]
  %v868 = vld [vmem:[%s5] sm:$0x3]
  %v870 = vlaneseq
  %v871 = vshrl.u32 %v870, 7
  %v872 = vsub.s32 0, %v871
  %v873 = vrot.slane %v868, %v872
  %v874 = vlaneseq
  %v875 = vshrl.u32 %v874, 7
  %v876 = vsub.s32 1, %v875
  %v877 = vrot.slane %v868, %v876
  %v912 = vunpack.c.l.b16 %v836
  %v913 = vunpack.c.h.b16 %v836
  %v914 = vunpack.c.l.b16 %v837
  %v915 = vunpack.c.h.b16 %v837
  %v916 = vunpack.c.l.b16 %v838
  %v917 = vunpack.c.h.b16 %v838
  %v918 = vunpack.c.l.b16 %v839
  %v919 = vunpack.c.h.b16 %v839
  %v920 = vunpack.c.l.b16 %v840
  %v921 = vunpack.c.h.b16 %v840
  %v922 = vunpack.c.l.b16 %v841
  %v923 = vunpack.c.h.b16 %v841
  %v924 = vunpack.c.l.b16 %v842
  %v925 = vunpack.c.h.b16 %v842
  %v926 = vunpack.c.l.b16 %v843
  %v927 = vunpack.c.h.b16 %v843
  %v928 = vunpack.c.l.b16 %v844
  %v929 = vunpack.c.h.b16 %v844
  %v930 = vunpack.c.l.b16 %v845
  %v931 = vunpack.c.h.b16 %v845
  %v932 = vunpack.c.l.b16 %v846
  %v933 = vunpack.c.h.b16 %v846
  %v934 = vunpack.c.l.b16 %v847
  %v935 = vunpack.c.h.b16 %v847
  %v936 = vunpack.c.l.b16 %v848
  %v937 = vunpack.c.h.b16 %v848
  %v938 = vunpack.c.l.b16 %v849
  %v939 = vunpack.c.h.b16 %v849
  %v940 = vunpack.c.l.b16 %v850
  %v941 = vunpack.c.h.b16 %v850
  %v942 = vunpack.c.l.b16 %v851
  %v943 = vunpack.c.h.b16 %v851
  %v944 = vunpack.c.l.b16 %v852
  %v945 = vunpack.c.h.b16 %v852
  %v946 = vunpack.c.l.b16 %v853
  %v947 = vunpack.c.h.b16 %v853
  %v948 = vunpack.c.l.b16 %v854
  %v949 = vunpack.c.h.b16 %v854
  %v950 = vunpack.c.l.b16 %v855
  %v951 = vunpack.c.h.b16 %v855
  %v952 = vunpack.c.l.b16 %v856
  %v953 = vunpack.c.h.b16 %v856
  %v954 = vunpack.c.l.b16 %v857
  %v955 = vunpack.c.h.b16 %v857
  %v956 = vunpack.c.l.b16 %v858
  %v957 = vunpack.c.h.b16 %v858
  %v958 = vunpack.c.l.b16 %v859
  %v959 = vunpack.c.h.b16 %v859
  %v960 = vunpack.c.l.b16 %v860
  %v961 = vunpack.c.h.b16 %v860
  %v962 = vunpack.c.l.b16 %v861
  %v963 = vunpack.c.h.b16 %v861
  %v964 = vunpack.c.l.b16 %v862
  %v965 = vunpack.c.h.b16 %v862
  %v966 = vunpack.c.l.b16 %v863
  %v967 = vunpack.c.h.b16 %v863
  %v968 = vunpack.c.l.b16 %v864
  %v969 = vunpack.c.h.b16 %v864
  %v970 = vunpack.c.l.b16 %v865
  %v971 = vunpack.c.h.b16 %v865
  %v972 = vunpack.c.l.b16 %v866
  %v973 = vunpack.c.h.b16 %v866
  %v974 = vunpack.c.l.b16 %v867
  %v975 = vunpack.c.h.b16 %v867
  %v976 = vpack.c.b16 %v914, %v912
  %v977 = vpack.c.b16 %v915, %v913
  %v978 = vpack.c.b16 %v918, %v916
  %v979 = vpack.c.b16 %v919, %v917
  %v980 = vpack.c.b16 %v922, %v920
  %v981 = vpack.c.b16 %v923, %v921
  %v982 = vpack.c.b16 %v926, %v924
  %v983 = vpack.c.b16 %v927, %v925
  %v984 = vpack.c.b16 %v930, %v928
  %v985 = vpack.c.b16 %v931, %v929
  %v986 = vpack.c.b16 %v934, %v932
  %v987 = vpack.c.b16 %v935, %v933
  %v988 = vpack.c.b16 %v938, %v936
  %v989 = vpack.c.b16 %v939, %v937
  %v990 = vpack.c.b16 %v942, %v940
  %v991 = vpack.c.b16 %v943, %v941
  %v992 = vpack.c.b16 %v946, %v944
  %v993 = vpack.c.b16 %v947, %v945
  %v994 = vpack.c.b16 %v950, %v948
  %v995 = vpack.c.b16 %v951, %v949
  %v996 = vpack.c.b16 %v954, %v952
  %v997 = vpack.c.b16 %v955, %v953
  %v998 = vpack.c.b16 %v958, %v956
  %v999 = vpack.c.b16 %v959, %v957
  %v1000 = vpack.c.b16 %v962, %v960
  %v1001 = vpack.c.b16 %v963, %v961
  %v1002 = vpack.c.b16 %v966, %v964
  %v1003 = vpack.c.b16 %v967, %v965
  %v1004 = vpack.c.b16 %v970, %v968
  %v1005 = vpack.c.b16 %v971, %v969
  %v1006 = vpack.c.b16 %v974, %v972
  %v1007 = vpack.c.b16 %v975, %v973
  %1040 = vmatprep.subr.bf16.mxu0 %v977
  %1041 = vmatpush1.bf16.msra.mxu0 %v976
  %1042 = vmatprep.subr.bf16.mxu0 %v979
  %1043 = vmatpush1.bf16.msra.mxu0 %v978
  %1044 = vmatprep.subr.bf16.mxu0 %v981
  %1045 = vmatpush1.bf16.msra.mxu0 %v980
  %1046 = vmatprep.subr.bf16.mxu0 %v983
  %1047 = vmatpush1.bf16.msra.mxu0 %v982
  %1048 = vmatprep.subr.bf16.mxu0 %v985
  %1049 = vmatpush1.bf16.msra.mxu0 %v984
  %1050 = vmatprep.subr.bf16.mxu0 %v987
  %1051 = vmatpush1.bf16.msra.mxu0 %v986
  %1052 = vmatprep.subr.bf16.mxu0 %v989
  %1053 = vmatpush1.bf16.msra.mxu0 %v988
  %1054 = vmatprep.subr.bf16.mxu0 %v991
  %1055 = vmatpush1.bf16.msra.mxu0 %v990
  %1056 = vmatprep.subr.bf16.mxu0 %v993
  %1057 = vmatpush1.bf16.msra.mxu0 %v992
  %1058 = vmatprep.subr.bf16.mxu0 %v995
  %1059 = vmatpush1.bf16.msra.mxu0 %v994
  %1060 = vmatprep.subr.bf16.mxu0 %v997
  %1061 = vmatpush1.bf16.msra.mxu0 %v996
  %1062 = vmatprep.subr.bf16.mxu0 %v999
  %1063 = vmatpush1.bf16.msra.mxu0 %v998
  %1064 = vmatprep.subr.bf16.mxu0 %v1001
  %1065 = vmatpush1.bf16.msra.mxu0 %v1000
  %1066 = vmatprep.subr.bf16.mxu0 %v1003
  %1067 = vmatpush1.bf16.msra.mxu0 %v1002
  %1068 = vmatprep.subr.bf16.mxu0 %v1005
  %1069 = vmatpush1.bf16.msra.mxu0 %v1004
  %1070 = vmatprep.subr.bf16.mxu0 %v1007
  %1071 = vmatpush1.bf16.msra.mxu0 %v1006
  %1072 = vmatprep.mubr.bf16.mxu0 %v821
  %1073 = vmatmul.mubr.bf16.gmra.mrb[0].mxu0 %v820
  %v1074 = vpop.f32.mrb[0].mxu0
  %v1075 = vadd.f32 %v873, %v1074
  %v1076 = vpop.f32.mrb[0].mxu0
  %v1077 = vadd.f32 %v877, %v1076
  %v1078 = vpop.f32.mrb[0].mxu0
  %v1079 = vadd.f32 %v873, %v1078
  %v1080 = vpop.f32.mrb[0].mxu0
  %v1081 = vadd.f32 %v877, %v1080
  %1082 = vmatprep.mubr.bf16.mxu0 %v823
  %1083 = vmatmul.mubr.bf16.gmra.mrb[0].mxu0 %v822
  %v1084 = vpop.f32.mrb[0].mxu0
  %v1085 = vadd.f32 %v873, %v1084
  %v1086 = vpop.f32.mrb[0].mxu0
  %v1087 = vadd.f32 %v877, %v1086
  %v1088 = vpop.f32.mrb[0].mxu0
  %v1089 = vadd.f32 %v873, %v1088
  %v1090 = vpop.f32.mrb[0].mxu0
  %v1091 = vadd.f32 %v877, %v1090
  %1092 = vmatprep.mubr.bf16.mxu0 %v825
  %1093 = vmatmul.mubr.bf16.gmra.mrb[0].mxu0 %v824
  %v1094 = vpop.f32.mrb[0].mxu0
  %v1095 = vadd.f32 %v873, %v1094
  %v1096 = vpop.f32.mrb[0].mxu0
  %v1097 = vadd.f32 %v877, %v1096
  %v1098 = vpop.f32.mrb[0].mxu0
  %v1099 = vadd.f32 %v873, %v1098
  %v1100 = vpop.f32.mrb[0].mxu0
  %v1101 = vadd.f32 %v877, %v1100
  %1102 = vmatprep.mubr.bf16.mxu0 %v827
  %1103 = vmatmul.mubr.bf16.gmra.mrb[0].mxu0 %v826
  %v1104 = vpop.f32.mrb[0].mxu0
  %v1105 = vadd.f32 %v873, %v1104
  %v1106 = vpop.f32.mrb[0].mxu0
  %v1107 = vadd.f32 %v877, %v1106
  %v1108 = vpop.f32.mrb[0].mxu0
  %v1109 = vadd.f32 %v873, %v1108
  %v1110 = vpop.f32.mrb[0].mxu0
  %v1111 = vadd.f32 %v877, %v1110
  %1112 = vmatprep.mubr.bf16.mxu0 %v829
  %1113 = vmatmul.mubr.bf16.gmra.mrb[0].mxu0 %v828
  %v1114 = vpop.f32.mrb[0].mxu0
  %v1115 = vadd.f32 %v873, %v1114
  %v1116 = vpop.f32.mrb[0].mxu0
  %v1117 = vadd.f32 %v877, %v1116
  %v1118 = vpop.f32.mrb[0].mxu0
  %v1119 = vadd.f32 %v873, %v1118
  %v1120 = vpop.f32.mrb[0].mxu0
  %v1121 = vadd.f32 %v877, %v1120
  %1122 = vmatprep.mubr.bf16.mxu0 %v831
  %1123 = vmatmul.mubr.bf16.gmra.mrb[0].mxu0 %v830
  %v1124 = vpop.f32.mrb[0].mxu0
  %v1125 = vadd.f32 %v873, %v1124
  %v1126 = vpop.f32.mrb[0].mxu0
  %v1127 = vadd.f32 %v877, %v1126
  %v1128 = vpop.f32.mrb[0].mxu0
  %v1129 = vadd.f32 %v873, %v1128
  %v1130 = vpop.f32.mrb[0].mxu0
  %v1131 = vadd.f32 %v877, %v1130
  %1132 = vmatprep.mubr.bf16.mxu0 %v833
  %1133 = vmatmul.mubr.bf16.gmra.mrb[0].mxu0 %v832
  %v1134 = vpop.f32.mrb[0].mxu0
  %v1135 = vadd.f32 %v873, %v1134
  %v1136 = vpop.f32.mrb[0].mxu0
  %v1137 = vadd.f32 %v877, %v1136
  %v1138 = vpop.f32.mrb[0].mxu0
  %v1139 = vadd.f32 %v873, %v1138
  %v1140 = vpop.f32.mrb[0].mxu0
  %v1141 = vadd.f32 %v877, %v1140
  %1142 = vmatprep.mubr.bf16.mxu0 %v835
  %1143 = vmatmul.mubr.bf16.gmra.mrb[0].mxu0 %v834
  %v1144 = vpop.f32.mrb[0].mxu0
  %v1145 = vadd.f32 %v873, %v1144
  %v1146 = vpop.f32.mrb[0].mxu0
  %v1147 = vadd.f32 %v877, %v1146
  %v1148 = vpop.f32.mrb[0].mxu0
  %v1149 = vadd.f32 %v873, %v1148
  %v1150 = vpop.f32.mrb[0].mxu0
  %v1151 = vadd.f32 %v877, %v1150
  %1152 = vdwg.mxu0
  %v1153 = vmax.f32 %v742, 0.0
  %v1154 = vmax.f32 %v744, 0.0
  %v1155 = vmax.f32 %v746, 0.0
  %v1156 = vmax.f32 %v748, 0.0
  %v1157 = vmax.f32 %v752, 0.0
  %v1158 = vmax.f32 %v754, 0.0
  %v1159 = vmax.f32 %v756, 0.0
  %v1160 = vmax.f32 %v758, 0.0
  %v1161 = vmax.f32 %v762, 0.0
  %v1162 = vmax.f32 %v764, 0.0
  %v1163 = vmax.f32 %v766, 0.0
  %v1164 = vmax.f32 %v768, 0.0
  %v1165 = vmax.f32 %v772, 0.0
  %v1166 = vmax.f32 %v774, 0.0
  %v1167 = vmax.f32 %v776, 0.0
  %v1168 = vmax.f32 %v778, 0.0
  %v1169 = vmax.f32 %v782, 0.0
  %v1170 = vmax.f32 %v784, 0.0
  %v1171 = vmax.f32 %v786, 0.0
  %v1172 = vmax.f32 %v788, 0.0
  %v1173 = vmax.f32 %v792, 0.0
  %v1174 = vmax.f32 %v794, 0.0
  %v1175 = vmax.f32 %v796, 0.0
  %v1176 = vmax.f32 %v798, 0.0
  %v1177 = vmax.f32 %v802, 0.0
  %v1178 = vmax.f32 %v804, 0.0
  %v1179 = vmax.f32 %v806, 0.0
  %v1180 = vmax.f32 %v808, 0.0
  %v1181 = vmax.f32 %v812, 0.0
  %v1182 = vmax.f32 %v814, 0.0
  %v1183 = vmax.f32 %v816, 0.0
  %v1184 = vmax.f32 %v818, 0.0
  %v1185 = vmax.f32 %v1075, 0.0
  %v1186 = vmax.f32 %v1077, 0.0
  %v1187 = vmax.f32 %v1079, 0.0
  %v1188 = vmax.f32 %v1081, 0.0
  %v1189 = vmax.f32 %v1085, 0.0
  %v1190 = vmax.f32 %v1087, 0.0
  %v1191 = vmax.f32 %v1089, 0.0
  %v1192 = vmax.f32 %v1091, 0.0
  %v1193 = vmax.f32 %v1095, 0.0
  %v1194 = vmax.f32 %v1097, 0.0
  %v1195 = vmax.f32 %v1099, 0.0
  %v1196 = vmax.f32 %v1101, 0.0
  %v1197 = vmax.f32 %v1105, 0.0
  %v1198 = vmax.f32 %v1107, 0.0
  %v1199 = vmax.f32 %v1109, 0.0
  %v1200 = vmax.f32 %v1111, 0.0
  %v1201 = vmax.f32 %v1115, 0.0
  %v1202 = vmax.f32 %v1117, 0.0
  %v1203 = vmax.f32 %v1119, 0.0
  %v1204 = vmax.f32 %v1121, 0.0
  %v1205 = vmax.f32 %v1125, 0.0
  %v1206 = vmax.f32 %v1127, 0.0
  %v1207 = vmax.f32 %v1129, 0.0
  %v1208 = vmax.f32 %v1131, 0.0
  %v1209 = vmax.f32 %v1135, 0.0
  %v1210 = vmax.f32 %v1137, 0.0
  %v1211 = vmax.f32 %v1139, 0.0
  %v1212 = vmax.f32 %v1141, 0.0
  %v1213 = vmax.f32 %v1145, 0.0
  %v1214 = vmax.f32 %v1147, 0.0
  %v1215 = vmax.f32 %v1149, 0.0
  %v1216 = vmax.f32 %v1151, 0.0
  %v1217 = vld [vmem:[%s6] sm:$0xff]
  %v1218 = vld [vmem:[%s6 + $0x8] sm:$0xff]
  %v1219 = vld [vmem:[%s6 + $0x10] sm:$0xff]
  %v1220 = vld [vmem:[%s6 + $0x18] sm:$0xff]
  %v1221 = vld [vmem:[%s6 + $0x20] sm:$0xff]
  %v1222 = vld [vmem:[%s6 + $0x28] sm:$0xff]
  %v1223 = vld [vmem:[%s6 + $0x30] sm:$0xff]
  %v1224 = vld [vmem:[%s6 + $0x38] sm:$0xff]
  %v1225 = vld [vmem:[%s6 + $0x40] sm:$0xff]
  %v1226 = vld [vmem:[%s6 + $0x48] sm:$0xff]
  %v1227 = vld [vmem:[%s6 + $0x50] sm:$0xff]
  %v1228 = vld [vmem:[%s6 + $0x58] sm:$0xff]
  %v1229 = vld [vmem:[%s6 + $0x60] sm:$0xff]
  %v1230 = vld [vmem:[%s6 + $0x68] sm:$0xff]
  %v1231 = vld [vmem:[%s6 + $0x70] sm:$0xff]
  %v1232 = vld [vmem:[%s6 + $0x78] sm:$0xff]
  %v1233 = vld [vmem:[%s6 + $0x80] sm:$0xff]
  %v1234 = vld [vmem:[%s6 + $0x88] sm:$0xff]
  %v1235 = vld [vmem:[%s6 + $0x90] sm:$0xff]
  %v1236 = vld [vmem:[%s6 + $0x98] sm:$0xff]
  %v1237 = vld [vmem:[%s6 + $0xa0] sm:$0xff]
  %v1238 = vld [vmem:[%s6 + $0xa8] sm:$0xff]
  %v1239 = vld [vmem:[%s6 + $0xb0] sm:$0xff]
  %v1240 = vld [vmem:[%s6 + $0xb8] sm:$0xff]
  %v1241 = vld [vmem:[%s6 + $0xc0] sm:$0xff]
  %v1242 = vld [vmem:[%s6 + $0xc8] sm:$0xff]
  %v1243 = vld [vmem:[%s6 + $0xd0] sm:$0xff]
  %v1244 = vld [vmem:[%s6 + $0xd8] sm:$0xff]
  %v1245 = vld [vmem:[%s6 + $0xe0] sm:$0xff]
  %v1246 = vld [vmem:[%s6 + $0xe8] sm:$0xff]
  %v1247 = vld [vmem:[%s6 + $0xf0] sm:$0xff]
  %v1248 = vld [vmem:[%s6 + $0xf8] sm:$0xff]
  %v1249 = vld [vmem:[%s7] sm:$0xff]
  %v1250 = vld [vmem:[%s7 + $0x8] sm:$0xff]
  %v1251 = vld [vmem:[%s7 + $0x10] sm:$0xff]
  %v1252 = vld [vmem:[%s7 + $0x18] sm:$0xff]
  %v1253 = vld [vmem:[%s7 + $0x20] sm:$0xff]
  %v1254 = vld [vmem:[%s7 + $0x28] sm:$0xff]
  %v1255 = vld [vmem:[%s7 + $0x30] sm:$0xff]
  %v1256 = vld [vmem:[%s7 + $0x38] sm:$0xff]
  %v1257 = vld [vmem:[%s7 + $0x40] sm:$0xff]
  %v1258 = vld [vmem:[%s7 + $0x48] sm:$0xff]
  %v1259 = vld [vmem:[%s7 + $0x50] sm:$0xff]
  %v1260 = vld [vmem:[%s7 + $0x58] sm:$0xff]
  %v1261 = vld [vmem:[%s7 + $0x60] sm:$0xff]
  %v1262 = vld [vmem:[%s7 + $0x68] sm:$0xff]
  %v1263 = vld [vmem:[%s7 + $0x70] sm:$0xff]
  %v1264 = vld [vmem:[%s7 + $0x78] sm:$0xff]
  %v1265 = vld [vmem:[%s7 + $0x80] sm:$0xff]
  %v1266 = vld [vmem:[%s7 + $0x88] sm:$0xff]
  %v1267 = vld [vmem:[%s7 + $0x90] sm:$0xff]
  %v1268 = vld [vmem:[%s7 + $0x98] sm:$0xff]
  %v1269 = vld [vmem:[%s7 + $0xa0] sm:$0xff]
  %v1270 = vld [vmem:[%s7 + $0xa8] sm:$0xff]
  %v1271 = vld [vmem:[%s7 + $0xb0] sm:$0xff]
  %v1272 = vld [vmem:[%s7 + $0xb8] sm:$0xff]
  %v1273 = vld [vmem:[%s7 + $0xc0] sm:$0xff]
  %v1274 = vld [vmem:[%s7 + $0xc8] sm:$0xff]
  %v1275 = vld [vmem:[%s7 + $0xd0] sm:$0xff]
  %v1276 = vld [vmem:[%s7 + $0xd8] sm:$0xff]
  %v1277 = vld [vmem:[%s7 + $0xe0] sm:$0xff]
  %v1278 = vld [vmem:[%s7 + $0xe8] sm:$0xff]
  %v1279 = vld [vmem:[%s7 + $0xf0] sm:$0xff]
  %v1280 = vld [vmem:[%s7 + $0xf8] sm:$0xff]
  %1281 = vmatprep.subr.mxu0 0.0
  %1282 = vmatpush1.msra.mxu0 %v1249
  %1283 = vmatprep.subr.mxu0 0.0
  %1284 = vmatpush1.msra.mxu0 %v1250
  %1285 = vmatprep.subr.mxu0 0.0
  %1286 = vmatpush1.msra.mxu0 %v1251
  %1287 = vmatprep.subr.mxu0 0.0
  %1288 = vmatpush1.msra.mxu0 %v1252
  %1289 = vmatprep.subr.mxu0 0.0
  %1290 = vmatpush1.msra.mxu0 %v1253
  %1291 = vmatprep.subr.mxu0 0.0
  %1292 = vmatpush1.msra.mxu0 %v1254
  %1293 = vmatprep.subr.mxu0 0.0
  %1294 = vmatpush1.msra.mxu0 %v1255
  %1295 = vmatprep.subr.mxu0 0.0
  %1296 = vmatpush1.msra.mxu0 %v1256
  %1297 = vmatprep.subr.mxu0 0.0
  %1298 = vmatpush1.msra.mxu0 %v1257
  %1299 = vmatprep.subr.mxu0 0.0
  %1300 = vmatpush1.msra.mxu0 %v1258
  %1301 = vmatprep.subr.mxu0 0.0
  %1302 = vmatpush1.msra.mxu0 %v1259
  %1303 = vmatprep.subr.mxu0 0.0
  %1304 = vmatpush1.msra.mxu0 %v1260
  %1305 = vmatprep.subr.mxu0 0.0
  %1306 = vmatpush1.msra.mxu0 %v1261
  %1307 = vmatprep.subr.mxu0 0.0
  %1308 = vmatpush1.msra.mxu0 %v1262
  %1309 = vmatprep.subr.mxu0 0.0
  %1310 = vmatpush1.msra.mxu0 %v1263
  %1311 = vmatprep.subr.mxu0 0.0
  %1312 = vmatpush1.msra.mxu0 %v1264
  %1313 = vmatprep.subr.mxu0 0.0
  %1314 = vmatpush1.msra.mxu0 %v1265
  %1315 = vmatprep.subr.mxu0 0.0
  %1316 = vmatpush1.msra.mxu0 %v1266
  %1317 = vmatprep.subr.mxu0 0.0
  %1318 = vmatpush1.msra.mxu0 %v1267
  %1319 = vmatprep.subr.mxu0 0.0
  %1320 = vmatpush1.msra.mxu0 %v1268
  %1321 = vmatprep.subr.mxu0 0.0
  %1322 = vmatpush1.msra.mxu0 %v1269
  %1323 = vmatprep.subr.mxu0 0.0
  %1324 = vmatpush1.msra.mxu0 %v1270
  %1325 = vmatprep.subr.mxu0 0.0
  %1326 = vmatpush1.msra.mxu0 %v1271
  %1327 = vmatprep.subr.mxu0 0.0
  %1328 = vmatpush1.msra.mxu0 %v1272
  %1329 = vmatprep.subr.mxu0 0.0
  %1330 = vmatpush1.msra.mxu0 %v1273
  %1331 = vmatprep.subr.mxu0 0.0
  %1332 = vmatpush1.msra.mxu0 %v1274
  %1333 = vmatprep.subr.mxu0 0.0
  %1334 = vmatpush1.msra.mxu0 %v1275
  %1335 = vmatprep.subr.mxu0 0.0
  %1336 = vmatpush1.msra.mxu0 %v1276
  %1337 = vmatprep.subr.mxu0 0.0
  %1338 = vmatpush1.msra.mxu0 %v1277
  %1339 = vmatprep.subr.mxu0 0.0
  %1340 = vmatpush1.msra.mxu0 %v1278
  %1341 = vmatprep.subr.mxu0 0.0
  %1342 = vmatpush1.msra.mxu0 %v1279
  %1343 = vmatprep.subr.mxu0 0.0
  %1344 = vmatpush1.msra.mxu0 %v1280
  %1345 = vmatprep.mubr.f32.mxu0 %v1186
  %1346 = vmatmul.mubr.f32.gmra.mrb[0].mxu0 %v1185
  %v1347 = vpop.f32.mrb[0].mxu0
  %v1348 = vadd.f32 0.0, %v1347
  %v1349 = vpop.f32.mrb[0].mxu0
  %1350 = vmatprep.mubr.f32.mxu0 %v1188
  %1351 = vmatmul.mubr.f32.gmra.mrb[0].mxu0 %v1187
  %v1352 = vpop.f32.mrb[0].mxu0
  %v1353 = vadd.f32 0.0, %v1352
  %v1354 = vpop.f32.mrb[0].mxu0
  %1355 = vmatprep.mubr.f32.mxu0 %v1190
  %1356 = vmatmul.mubr.f32.gmra.mrb[0].mxu0 %v1189
  %v1357 = vpop.f32.mrb[0].mxu0
  %v1358 = vadd.f32 0.0, %v1357
  %v1359 = vpop.f32.mrb[0].mxu0
  %1360 = vmatprep.mubr.f32.mxu0 %v1192
  %1361 = vmatmul.mubr.f32.gmra.mrb[0].mxu0 %v1191
  %v1362 = vpop.f32.mrb[0].mxu0
  %v1363 = vadd.f32 0.0, %v1362
  %v1364 = vpop.f32.mrb[0].mxu0
  %1365 = vmatprep.mubr.f32.mxu0 %v1194
  %1366 = vmatmul.mubr.f32.gmra.mrb[0].mxu0 %v1193
  %v1367 = vpop.f32.mrb[0].mxu0
  %v1368 = vadd.f32 0.0, %v1367
  %v1369 = vpop.f32.mrb[0].mxu0
  %1370 = vmatprep.mubr.f32.mxu0 %v1196
  %1371 = vmatmul.mubr.f32.gmra.mrb[0].mxu0 %v1195
  %v1372 = vpop.f32.mrb[0].mxu0
  %v1373 = vadd.f32 0.0, %v1372
  %v1374 = vpop.f32.mrb[0].mxu0
  %1375 = vmatprep.mubr.f32.mxu0 %v1198
  %1376 = vmatmul.mubr.f32.gmra.mrb[0].mxu0 %v1197
  %v1377 = vpop.f32.mrb[0].mxu0
  %v1378 = vadd.f32 0.0, %v1377
  %v1379 = vpop.f32.mrb[0].mxu0
  %1380 = vmatprep.mubr.f32.mxu0 %v1200
  %1381 = vmatmul.mubr.f32.gmra.mrb[0].mxu0 %v1199
  %v1382 = vpop.f32.mrb[0].mxu0
  %v1383 = vadd.f32 0.0, %v1382
  %v1384 = vpop.f32.mrb[0].mxu0
  %1385 = vmatprep.mubr.f32.mxu0 %v1202
  %1386 = vmatmul.mubr.f32.gmra.mrb[0].mxu0 %v1201
  %v1387 = vpop.f32.mrb[0].mxu0
  %v1388 = vadd.f32 0.0, %v1387
  %v1389 = vpop.f32.mrb[0].mxu0
  %1390 = vmatprep.mubr.f32.mxu0 %v1204
  %1391 = vmatmul.mubr.f32.gmra.mrb[0].mxu0 %v1203
  %v1392 = vpop.f32.mrb[0].mxu0
  %v1393 = vadd.f32 0.0, %v1392
  %v1394 = vpop.f32.mrb[0].mxu0
  %1395 = vmatprep.mubr.f32.mxu0 %v1206
  %1396 = vmatmul.mubr.f32.gmra.mrb[0].mxu0 %v1205
  %v1397 = vpop.f32.mrb[0].mxu0
  %v1398 = vadd.f32 0.0, %v1397
  %v1399 = vpop.f32.mrb[0].mxu0
  %1400 = vmatprep.mubr.f32.mxu0 %v1208
  %1401 = vmatmul.mubr.f32.gmra.mrb[0].mxu0 %v1207
  %v1402 = vpop.f32.mrb[0].mxu0
  %v1403 = vadd.f32 0.0, %v1402
  %v1404 = vpop.f32.mrb[0].mxu0
  %1405 = vmatprep.mubr.f32.mxu0 %v1210
  %1406 = vmatmul.mubr.f32.gmra.mrb[0].mxu0 %v1209
  %v1407 = vpop.f32.mrb[0].mxu0
  %v1408 = vadd.f32 0.0, %v1407
  %v1409 = vpop.f32.mrb[0].mxu0
  %1410 = vmatprep.mubr.f32.mxu0 %v1212
  %1411 = vmatmul.mubr.f32.gmra.mrb[0].mxu0 %v1211
  %v1412 = vpop.f32.mrb[0].mxu0
  %v1413 = vadd.f32 0.0, %v1412
  %v1414 = vpop.f32.mrb[0].mxu0
  %1415 = vmatprep.mubr.f32.mxu0 %v1214
  %1416 = vmatmul.mubr.f32.gmra.mrb[0].mxu0 %v1213
  %v1417 = vpop.f32.mrb[0].mxu0
  %v1418 = vadd.f32 0.0, %v1417
  %v1419 = vpop.f32.mrb[0].mxu0
  %1420 = vmatprep.mubr.f32.mxu0 %v1216
  %1421 = vmatmul.mubr.f32.gmra.mrb[0].mxu0 %v1215
  %v1422 = vpop.f32.mrb[0].mxu0
  %v1423 = vadd.f32 0.0, %v1422
  %v1424 = vpop.f32.mrb[0].mxu0
  %1425 = vdwg.mxu0
  %1426 = vmatprep.subr.mxu0 0.0
  %1427 = vmatpush1.msra.mxu0 %v1217
  %1428 = vmatprep.subr.mxu0 0.0
  %1429 = vmatpush1.msra.mxu0 %v1218
  %1430 = vmatprep.subr.mxu0 0.0
  %1431 = vmatpush1.msra.mxu0 %v1219
  %1432 = vmatprep.subr.mxu0 0.0
  %1433 = vmatpush1.msra.mxu0 %v1220
  %1434 = vmatprep.subr.mxu0 0.0
  %1435 = vmatpush1.msra.mxu0 %v1221
  %1436 = vmatprep.subr.mxu0 0.0
  %1437 = vmatpush1.msra.mxu0 %v1222
  %1438 = vmatprep.subr.mxu0 0.0
  %1439 = vmatpush1.msra.mxu0 %v1223
  %1440 = vmatprep.subr.mxu0 0.0
  %1441 = vmatpush1.msra.mxu0 %v1224
  %1442 = vmatprep.subr.mxu0 0.0
  %1443 = vmatpush1.msra.mxu0 %v1225
  %1444 = vmatprep.subr.mxu0 0.0
  %1445 = vmatpush1.msra.mxu0 %v1226
  %1446 = vmatprep.subr.mxu0 0.0
  %1447 = vmatpush1.msra.mxu0 %v1227
  %1448 = vmatprep.subr.mxu0 0.0
  %1449 = vmatpush1.msra.mxu0 %v1228
  %1450 = vmatprep.subr.mxu0 0.0
  %1451 = vmatpush1.msra.mxu0 %v1229
  %1452 = vmatprep.subr.mxu0 0.0
  %1453 = vmatpush1.msra.mxu0 %v1230
  %1454 = vmatprep.subr.mxu0 0.0
  %1455 = vmatpush1.msra.mxu0 %v1231
  %1456 = vmatprep.subr.mxu0 0.0
  %1457 = vmatpush1.msra.mxu0 %v1232
  %1458 = vmatprep.subr.mxu0 0.0
  %1459 = vmatpush1.msra.mxu0 %v1233
  %1460 = vmatprep.subr.mxu0 0.0
  %1461 = vmatpush1.msra.mxu0 %v1234
  %1462 = vmatprep.subr.mxu0 0.0
  %1463 = vmatpush1.msra.mxu0 %v1235
  %1464 = vmatprep.subr.mxu0 0.0
  %1465 = vmatpush1.msra.mxu0 %v1236
  %1466 = vmatprep.subr.mxu0 0.0
  %1467 = vmatpush1.msra.mxu0 %v1237
  %1468 = vmatprep.subr.mxu0 0.0
  %1469 = vmatpush1.msra.mxu0 %v1238
  %1470 = vmatprep.subr.mxu0 0.0
  %1471 = vmatpush1.msra.mxu0 %v1239
  %1472 = vmatprep.subr.mxu0 0.0
  %1473 = vmatpush1.msra.mxu0 %v1240
  %1474 = vmatprep.subr.mxu0 0.0
  %1475 = vmatpush1.msra.mxu0 %v1241
  %1476 = vmatprep.subr.mxu0 0.0
  %1477 = vmatpush1.msra.mxu0 %v1242
  %1478 = vmatprep.subr.mxu0 0.0
  %1479 = vmatpush1.msra.mxu0 %v1243
  %1480 = vmatprep.subr.mxu0 0.0
  %1481 = vmatpush1.msra.mxu0 %v1244
  %1482 = vmatprep.subr.mxu0 0.0
  %1483 = vmatpush1.msra.mxu0 %v1245
  %1484 = vmatprep.subr.mxu0 0.0
  %1485 = vmatpush1.msra.mxu0 %v1246
  %1486 = vmatprep.subr.mxu0 0.0
  %1487 = vmatpush1.msra.mxu0 %v1247
  %1488 = vmatprep.subr.mxu0 0.0
  %1489 = vmatpush1.msra.mxu0 %v1248
  %1490 = vmatprep.mubr.f32.mxu0 %v1154
  %1491 = vmatmul.mubr.f32.gmra.mrb[0].mxu0 %v1153
  %v1492 = vpop.f32.mrb[0].mxu0
  %v1493 = vadd.f32 %v1348, %v1492
  %v1494 = vpop.f32.mrb[0].mxu0
  %1495 = vmatprep.mubr.f32.mxu0 %v1156
  %1496 = vmatmul.mubr.f32.gmra.mrb[0].mxu0 %v1155
  %v1497 = vpop.f32.mrb[0].mxu0
  %v1498 = vadd.f32 %v1353, %v1497
  %v1499 = vpop.f32.mrb[0].mxu0
  %1500 = vmatprep.mubr.f32.mxu0 %v1158
  %1501 = vmatmul.mubr.f32.gmra.mrb[0].mxu0 %v1157
  %v1502 = vpop.f32.mrb[0].mxu0
  %v1503 = vadd.f32 %v1358, %v1502
  %v1504 = vpop.f32.mrb[0].mxu0
  %1505 = vmatprep.mubr.f32.mxu0 %v1160
  %1506 = vmatmul.mubr.f32.gmra.mrb[0].mxu0 %v1159
  %v1507 = vpop.f32.mrb[0].mxu0
  %v1508 = vadd.f32 %v1363, %v1507
  %v1509 = vpop.f32.mrb[0].mxu0
  %1510 = vmatprep.mubr.f32.mxu0 %v1162
  %1511 = vmatmul.mubr.f32.gmra.mrb[0].mxu0 %v1161
  %v1512 = vpop.f32.mrb[0].mxu0
  %v1513 = vadd.f32 %v1368, %v1512
  %v1514 = vpop.f32.mrb[0].mxu0
  %1515 = vmatprep.mubr.f32.mxu0 %v1164
  %1516 = vmatmul.mubr.f32.gmra.mrb[0].mxu0 %v1163
  %v1517 = vpop.f32.mrb[0].mxu0
  %v1518 = vadd.f32 %v1373, %v1517
  %v1519 = vpop.f32.mrb[0].mxu0
  %1520 = vmatprep.mubr.f32.mxu0 %v1166
  %1521 = vmatmul.mubr.f32.gmra.mrb[0].mxu0 %v1165
  %v1522 = vpop.f32.mrb[0].mxu0
  %v1523 = vadd.f32 %v1378, %v1522
  %v1524 = vpop.f32.mrb[0].mxu0
  %1525 = vmatprep.mubr.f32.mxu0 %v1168
  %1526 = vmatmul.mubr.f32.gmra.mrb[0].mxu0 %v1167
  %v1527 = vpop.f32.mrb[0].mxu0
  %v1528 = vadd.f32 %v1383, %v1527
  %v1529 = vpop.f32.mrb[0].mxu0
  %1530 = vmatprep.mubr.f32.mxu0 %v1170
  %1531 = vmatmul.mubr.f32.gmra.mrb[0].mxu0 %v1169
  %v1532 = vpop.f32.mrb[0].mxu0
  %v1533 = vadd.f32 %v1388, %v1532
  %v1534 = vpop.f32.mrb[0].mxu0
  %1535 = vmatprep.mubr.f32.mxu0 %v1172
  %1536 = vmatmul.mubr.f32.gmra.mrb[0].mxu0 %v1171
  %v1537 = vpop.f32.mrb[0].mxu0
  %v1538 = vadd.f32 %v1393, %v1537
  %v1539 = vpop.f32.mrb[0].mxu0
  %1540 = vmatprep.mubr.f32.mxu0 %v1174
  %1541 = vmatmul.mubr.f32.gmra.mrb[0].mxu0 %v1173
  %v1542 = vpop.f32.mrb[0].mxu0
  %v1543 = vadd.f32 %v1398, %v1542
  %v1544 = vpop.f32.mrb[0].mxu0
  %1545 = vmatprep.mubr.f32.mxu0 %v1176
  %1546 = vmatmul.mubr.f32.gmra.mrb[0].mxu0 %v1175
  %v1547 = vpop.f32.mrb[0].mxu0
  %v1548 = vadd.f32 %v1403, %v1547
  %v1549 = vpop.f32.mrb[0].mxu0
  %1550 = vmatprep.mubr.f32.mxu0 %v1178
  %1551 = vmatmul.mubr.f32.gmra.mrb[0].mxu0 %v1177
  %v1552 = vpop.f32.mrb[0].mxu0
  %v1553 = vadd.f32 %v1408, %v1552
  %v1554 = vpop.f32.mrb[0].mxu0
  %1555 = vmatprep.mubr.f32.mxu0 %v1180
  %1556 = vmatmul.mubr.f32.gmra.mrb[0].mxu0 %v1179
  %v1557 = vpop.f32.mrb[0].mxu0
  %v1558 = vadd.f32 %v1413, %v1557
  %v1559 = vpop.f32.mrb[0].mxu0
  %1560 = vmatprep.mubr.f32.mxu0 %v1182
  %1561 = vmatmul.mubr.f32.gmra.mrb[0].mxu0 %v1181
  %v1562 = vpop.f32.mrb[0].mxu0
  %v1563 = vadd.f32 %v1418, %v1562
  %v1564 = vpop.f32.mrb[0].mxu0
  %1565 = vmatprep.mubr.f32.mxu0 %v1184
  %1566 = vmatmul.mubr.f32.gmra.mrb[0].mxu0 %v1183
  %v1567 = vpop.f32.mrb[0].mxu0
  %v1568 = vadd.f32 %v1423, %v1567
  %v1569 = vpop.f32.mrb[0].mxu0
  %1570 = vdwg.mxu0
  %v1571 = vld [vmem:[%s8] sm:$0x1]
  %v1573 = vlaneseq
  %v1574 = vshrl.u32 %v1573, 7
  %v1575 = vsub.s32 0, %v1574
  %v1576 = vrot.slane %v1571, %v1575
  %v1578 = vadd.f32 %v1493, %v1576
  %v1579 = vadd.f32 %v1498, %v1576
  %v1580 = vadd.f32 %v1503, %v1576
  %v1581 = vadd.f32 %v1508, %v1576
  %v1582 = vadd.f32 %v1513, %v1576
  %v1583 = vadd.f32 %v1518, %v1576
  %v1584 = vadd.f32 %v1523, %v1576
  %v1585 = vadd.f32 %v1528, %v1576
  %v1586 = vadd.f32 %v1533, %v1576
  %v1587 = vadd.f32 %v1538, %v1576
  %v1588 = vadd.f32 %v1543, %v1576
  %v1589 = vadd.f32 %v1548, %v1576
  %v1590 = vadd.f32 %v1553, %v1576
  %v1591 = vadd.f32 %v1558, %v1576
  %v1592 = vadd.f32 %v1563, %v1576
  %v1593 = vadd.f32 %v1568, %v1576
  %1610 = vrot.lane.b32.xlu0 %v1578, 127
  %v1611 = vpop.permute.xlu0 %1610
  %1612 = vrot.lane.b32.xlu0 %v1579, 127
  %v1613 = vpop.permute.xlu0 %1612
  %1614 = vrot.lane.b32.xlu0 %v1580, 127
  %v1615 = vpop.permute.xlu0 %1614
  %1616 = vrot.lane.b32.xlu0 %v1581, 127
  %v1617 = vpop.permute.xlu0 %1616
  %1618 = vrot.lane.b32.xlu0 %v1582, 127
  %v1619 = vpop.permute.xlu0 %1618
  %1620 = vrot.lane.b32.xlu0 %v1583, 127
  %v1621 = vpop.permute.xlu0 %1620
  %1622 = vrot.lane.b32.xlu0 %v1584, 127
  %v1623 = vpop.permute.xlu0 %1622
  %1624 = vrot.lane.b32.xlu0 %v1585, 127
  %v1625 = vpop.permute.xlu0 %1624
  %1626 = vrot.lane.b32.xlu0 %v1586, 127
  %v1627 = vpop.permute.xlu0 %1626
  %1628 = vrot.lane.b32.xlu0 %v1587, 127
  %v1629 = vpop.permute.xlu0 %1628
  %1630 = vrot.lane.b32.xlu0 %v1588, 127
  %v1631 = vpop.permute.xlu0 %1630
  %1632 = vrot.lane.b32.xlu0 %v1589, 127
  %v1633 = vpop.permute.xlu0 %1632
  %1634 = vrot.lane.b32.xlu0 %v1590, 127
  %v1635 = vpop.permute.xlu0 %1634
  %1636 = vrot.lane.b32.xlu0 %v1591, 127
  %v1637 = vpop.permute.xlu0 %1636
  %1638 = vrot.lane.b32.xlu0 %v1592, 127
  %v1639 = vpop.permute.xlu0 %1638
  %1640 = vrot.lane.b32.xlu0 %v1593, 127
  %v1641 = vpop.permute.xlu0 %1640
  %v1658 = vmax.f32 %v1578, %v1611
  %v1659 = vmax.f32 %v1579, %v1613
  %v1660 = vmax.f32 %v1580, %v1615
  %v1661 = vmax.f32 %v1581, %v1617
  %v1662 = vmax.f32 %v1582, %v1619
  %v1663 = vmax.f32 %v1583, %v1621
  %v1664 = vmax.f32 %v1584, %v1623
  %v1665 = vmax.f32 %v1585, %v1625
  %v1666 = vmax.f32 %v1586, %v1627
  %v1667 = vmax.f32 %v1587, %v1629
  %v1668 = vmax.f32 %v1588, %v1631
  %v1669 = vmax.f32 %v1589, %v1633
  %v1670 = vmax.f32 %v1590, %v1635
  %v1671 = vmax.f32 %v1591, %v1637
  %v1672 = vmax.f32 %v1592, %v1639
  %v1673 = vmax.f32 %v1593, %v1641
  %v1674 = vsub.f32 %v1578, %v1658
  %v1675 = vsub.f32 %v1579, %v1659
  %v1676 = vsub.f32 %v1580, %v1660
  %v1677 = vsub.f32 %v1581, %v1661
  %v1678 = vsub.f32 %v1582, %v1662
  %v1679 = vsub.f32 %v1583, %v1663
  %v1680 = vsub.f32 %v1584, %v1664
  %v1681 = vsub.f32 %v1585, %v1665
  %v1682 = vsub.f32 %v1586, %v1666
  %v1683 = vsub.f32 %v1587, %v1667
  %v1684 = vsub.f32 %v1588, %v1668
  %v1685 = vsub.f32 %v1589, %v1669
  %v1686 = vsub.f32 %v1590, %v1670
  %v1687 = vsub.f32 %v1591, %v1671
  %v1688 = vsub.f32 %v1592, %v1672
  %v1689 = vsub.f32 %v1593, %v1673
  %v1690 = vmul.f32 %v1674, 1.442695
  %v1691 = vpow.pop %v1690
  %v1692 = vmul.f32 %v1675, 1.442695
  %v1693 = vpow.pop %v1692
  %v1694 = vmul.f32 %v1676, 1.442695
  %v1695 = vpow.pop %v1694
  %v1696 = vmul.f32 %v1677, 1.442695
  %v1697 = vpow.pop %v1696
  %v1698 = vmul.f32 %v1678, 1.442695
  %v1699 = vpow.pop %v1698
  %v1700 = vmul.f32 %v1679, 1.442695
  %v1701 = vpow.pop %v1700
  %v1702 = vmul.f32 %v1680, 1.442695
  %v1703 = vpow.pop %v1702
  %v1704 = vmul.f32 %v1681, 1.442695
  %v1705 = vpow.pop %v1704
  %v1706 = vmul.f32 %v1682, 1.442695
  %v1707 = vpow.pop %v1706
  %v1708 = vmul.f32 %v1683, 1.442695
  %v1709 = vpow.pop %v1708
  %v1710 = vmul.f32 %v1684, 1.442695
  %v1711 = vpow.pop %v1710
  %v1712 = vmul.f32 %v1685, 1.442695
  %v1713 = vpow.pop %v1712
  %v1714 = vmul.f32 %v1686, 1.442695
  %v1715 = vpow.pop %v1714
  %v1716 = vmul.f32 %v1687, 1.442695
  %v1717 = vpow.pop %v1716
  %v1718 = vmul.f32 %v1688, 1.442695
  %v1719 = vpow.pop %v1718
  %v1720 = vmul.f32 %v1689, 1.442695
  %v1721 = vpow.pop %v1720
  %1738 = vrot.lane.b32.xlu0 %v1658, 1
  %v1739 = vpop.permute.xlu0 %1738
  %1740 = vrot.lane.b32.xlu0 %v1659, 1
  %v1741 = vpop.permute.xlu0 %1740
  %1742 = vrot.lane.b32.xlu0 %v1660, 1
  %v1743 = vpop.permute.xlu0 %1742
  %1744 = vrot.lane.b32.xlu0 %v1661, 1
  %v1745 = vpop.permute.xlu0 %1744
  %1746 = vrot.lane.b32.xlu0 %v1662, 1
  %v1747 = vpop.permute.xlu0 %1746
  %1748 = vrot.lane.b32.xlu0 %v1663, 1
  %v1749 = vpop.permute.xlu0 %1748
  %1750 = vrot.lane.b32.xlu0 %v1664, 1
  %v1751 = vpop.permute.xlu0 %1750
  %1752 = vrot.lane.b32.xlu0 %v1665, 1
  %v1753 = vpop.permute.xlu0 %1752
  %1754 = vrot.lane.b32.xlu0 %v1666, 1
  %v1755 = vpop.permute.xlu0 %1754
  %1756 = vrot.lane.b32.xlu0 %v1667, 1
  %v1757 = vpop.permute.xlu0 %1756
  %1758 = vrot.lane.b32.xlu0 %v1668, 1
  %v1759 = vpop.permute.xlu0 %1758
  %1760 = vrot.lane.b32.xlu0 %v1669, 1
  %v1761 = vpop.permute.xlu0 %1760
  %1762 = vrot.lane.b32.xlu0 %v1670, 1
  %v1763 = vpop.permute.xlu0 %1762
  %1764 = vrot.lane.b32.xlu0 %v1671, 1
  %v1765 = vpop.permute.xlu0 %1764
  %1766 = vrot.lane.b32.xlu0 %v1672, 1
  %v1767 = vpop.permute.xlu0 %1766
  %1768 = vrot.lane.b32.xlu0 %v1673, 1
  %v1769 = vpop.permute.xlu0 %1768
  %v1786 = vsub.f32 %v1578, %v1739
  %v1787 = vsub.f32 %v1579, %v1741
  %v1788 = vsub.f32 %v1580, %v1743
  %v1789 = vsub.f32 %v1581, %v1745
  %v1790 = vsub.f32 %v1582, %v1747
  %v1791 = vsub.f32 %v1583, %v1749
  %v1792 = vsub.f32 %v1584, %v1751
  %v1793 = vsub.f32 %v1585, %v1753
  %v1794 = vsub.f32 %v1586, %v1755
  %v1795 = vsub.f32 %v1587, %v1757
  %v1796 = vsub.f32 %v1588, %v1759
  %v1797 = vsub.f32 %v1589, %v1761
  %v1798 = vsub.f32 %v1590, %v1763
  %v1799 = vsub.f32 %v1591, %v1765
  %v1800 = vsub.f32 %v1592, %v1767
  %v1801 = vsub.f32 %v1593, %v1769
  %v1802 = vmul.f32 %v1786, 1.442695
  %v1803 = vpow.pop %v1802
  %v1804 = vmul.f32 %v1787, 1.442695
  %v1805 = vpow.pop %v1804
  %v1806 = vmul.f32 %v1788, 1.442695
  %v1807 = vpow.pop %v1806
  %v1808 = vmul.f32 %v1789, 1.442695
  %v1809 = vpow.pop %v1808
  %v1810 = vmul.f32 %v1790, 1.442695
  %v1811 = vpow.pop %v1810
  %v1812 = vmul.f32 %v1791, 1.442695
  %v1813 = vpow.pop %v1812
  %v1814 = vmul.f32 %v1792, 1.442695
  %v1815 = vpow.pop %v1814
  %v1816 = vmul.f32 %v1793, 1.442695
  %v1817 = vpow.pop %v1816
  %v1818 = vmul.f32 %v1794, 1.442695
  %v1819 = vpow.pop %v1818
  %v1820 = vmul.f32 %v1795, 1.442695
  %v1821 = vpow.pop %v1820
  %v1822 = vmul.f32 %v1796, 1.442695
  %v1823 = vpow.pop %v1822
  %v1824 = vmul.f32 %v1797, 1.442695
  %v1825 = vpow.pop %v1824
  %v1826 = vmul.f32 %v1798, 1.442695
  %v1827 = vpow.pop %v1826
  %v1828 = vmul.f32 %v1799, 1.442695
  %v1829 = vpow.pop %v1828
  %v1830 = vmul.f32 %v1800, 1.442695
  %v1831 = vpow.pop %v1830
  %v1832 = vmul.f32 %v1801, 1.442695
  %v1833 = vpow.pop %v1832
  %1850 = vrot.lane.b32.xlu0 %v1803, 127
  %v1851 = vpop.permute.xlu0 %1850
  %1852 = vrot.lane.b32.xlu0 %v1805, 127
  %v1853 = vpop.permute.xlu0 %1852
  %1854 = vrot.lane.b32.xlu0 %v1807, 127
  %v1855 = vpop.permute.xlu0 %1854
  %1856 = vrot.lane.b32.xlu0 %v1809, 127
  %v1857 = vpop.permute.xlu0 %1856
  %1858 = vrot.lane.b32.xlu0 %v1811, 127
  %v1859 = vpop.permute.xlu0 %1858
  %1860 = vrot.lane.b32.xlu0 %v1813, 127
  %v1861 = vpop.permute.xlu0 %1860
  %1862 = vrot.lane.b32.xlu0 %v1815, 127
  %v1863 = vpop.permute.xlu0 %1862
  %1864 = vrot.lane.b32.xlu0 %v1817, 127
  %v1865 = vpop.permute.xlu0 %1864
  %1866 = vrot.lane.b32.xlu0 %v1819, 127
  %v1867 = vpop.permute.xlu0 %1866
  %1868 = vrot.lane.b32.xlu0 %v1821, 127
  %v1869 = vpop.permute.xlu0 %1868
  %1870 = vrot.lane.b32.xlu0 %v1823, 127
  %v1871 = vpop.permute.xlu0 %1870
  %1872 = vrot.lane.b32.xlu0 %v1825, 127
  %v1873 = vpop.permute.xlu0 %1872
  %1874 = vrot.lane.b32.xlu0 %v1827, 127
  %v1875 = vpop.permute.xlu0 %1874
  %1876 = vrot.lane.b32.xlu0 %v1829, 127
  %v1877 = vpop.permute.xlu0 %1876
  %1878 = vrot.lane.b32.xlu0 %v1831, 127
  %v1879 = vpop.permute.xlu0 %1878
  %1880 = vrot.lane.b32.xlu0 %v1833, 127
  %v1881 = vpop.permute.xlu0 %1880
  %v1898 = vadd.f32 %v1691, %v1851
  %v1899 = vadd.f32 %v1693, %v1853
  %v1900 = vadd.f32 %v1695, %v1855
  %v1901 = vadd.f32 %v1697, %v1857
  %v1902 = vadd.f32 %v1699, %v1859
  %v1903 = vadd.f32 %v1701, %v1861
  %v1904 = vadd.f32 %v1703, %v1863
  %v1905 = vadd.f32 %v1705, %v1865
  %v1906 = vadd.f32 %v1707, %v1867
  %v1907 = vadd.f32 %v1709, %v1869
  %v1908 = vadd.f32 %v1711, %v1871
  %v1909 = vadd.f32 %v1713, %v1873
  %v1910 = vadd.f32 %v1715, %v1875
  %v1911 = vadd.f32 %v1717, %v1877
  %v1912 = vadd.f32 %v1719, %v1879
  %v1913 = vadd.f32 %v1721, %v1881
  %v1914 = vlog2.pop %v1898
  %v1915 = vmul.f32 %v1914, 0.6931472
  %v1916 = vlog2.pop %v1899
  %v1917 = vmul.f32 %v1916, 0.6931472
  %v1918 = vlog2.pop %v1900
  %v1919 = vmul.f32 %v1918, 0.6931472
  %v1920 = vlog2.pop %v1901
  %v1921 = vmul.f32 %v1920, 0.6931472
  %v1922 = vlog2.pop %v1902
  %v1923 = vmul.f32 %v1922, 0.6931472
  %v1924 = vlog2.pop %v1903
  %v1925 = vmul.f32 %v1924, 0.6931472
  %v1926 = vlog2.pop %v1904
  %v1927 = vmul.f32 %v1926, 0.6931472
  %v1928 = vlog2.pop %v1905
  %v1929 = vmul.f32 %v1928, 0.6931472
  %v1930 = vlog2.pop %v1906
  %v1931 = vmul.f32 %v1930, 0.6931472
  %v1932 = vlog2.pop %v1907
  %v1933 = vmul.f32 %v1932, 0.6931472
  %v1934 = vlog2.pop %v1908
  %v1935 = vmul.f32 %v1934, 0.6931472
  %v1936 = vlog2.pop %v1909
  %v1937 = vmul.f32 %v1936, 0.6931472
  %v1938 = vlog2.pop %v1910
  %v1939 = vmul.f32 %v1938, 0.6931472
  %v1940 = vlog2.pop %v1911
  %v1941 = vmul.f32 %v1940, 0.6931472
  %v1942 = vlog2.pop %v1912
  %v1943 = vmul.f32 %v1942, 0.6931472
  %v1944 = vlog2.pop %v1913
  %v1945 = vmul.f32 %v1944, 0.6931472
  %v1946 = vadd.f32 %v1658, %v1915
  %v1947 = vadd.f32 %v1659, %v1917
  %v1948 = vadd.f32 %v1660, %v1919
  %v1949 = vadd.f32 %v1661, %v1921
  %v1950 = vadd.f32 %v1662, %v1923
  %v1951 = vadd.f32 %v1663, %v1925
  %v1952 = vadd.f32 %v1664, %v1927
  %v1953 = vadd.f32 %v1665, %v1929
  %v1954 = vadd.f32 %v1666, %v1931
  %v1955 = vadd.f32 %v1667, %v1933
  %v1956 = vadd.f32 %v1668, %v1935
  %v1957 = vadd.f32 %v1669, %v1937
  %v1958 = vadd.f32 %v1670, %v1939
  %v1959 = vadd.f32 %v1671, %v1941
  %v1960 = vadd.f32 %v1672, %v1943
  %v1961 = vadd.f32 %v1673, %v1945
  %v1962 = vlaneseq
  %v1963 = vand.u32 %v1962, 127
  %vm1964 = vcmp.ge.s32.totalorder %v1963, 4
  %vm1965 = vcmp.lt.s32.totalorder %v1963, 6
  %vm1966 = vmand %vm1964, %vm1965
  %1968 = vset.pattern.permute.xlu0 4
  %1969 = vperm.xlu0 %1968, %v1946
  %v1970 = vpop.permute.xlu0 %1969
  %1973 = vset.pattern.permute.xlu0 4
  %1974 = vperm.xlu0 %1973, %v1947
  %v1975 = vpop.permute.xlu0 %1974
  %1978 = vset.pattern.permute.xlu0 4
  %1979 = vperm.xlu0 %1978, %v1948
  %v1980 = vpop.permute.xlu0 %1979
  %1983 = vset.pattern.permute.xlu0 4
  %1984 = vperm.xlu0 %1983, %v1949
  %v1985 = vpop.permute.xlu0 %1984
  %1988 = vset.pattern.permute.xlu0 4
  %1989 = vperm.xlu0 %1988, %v1950
  %v1990 = vpop.permute.xlu0 %1989
  %1993 = vset.pattern.permute.xlu0 4
  %1994 = vperm.xlu0 %1993, %v1951
  %v1995 = vpop.permute.xlu0 %1994
  %1998 = vset.pattern.permute.xlu0 4
  %1999 = vperm.xlu0 %1998, %v1952
  %v2000 = vpop.permute.xlu0 %1999
  %2003 = vset.pattern.permute.xlu0 4
  %2004 = vperm.xlu0 %2003, %v1953
  %v2005 = vpop.permute.xlu0 %2004
  %2008 = vset.pattern.permute.xlu0 4
  %2009 = vperm.xlu0 %2008, %v1954
  %v2010 = vpop.permute.xlu0 %2009
  %2013 = vset.pattern.permute.xlu0 4
  %2014 = vperm.xlu0 %2013, %v1955
  %v2015 = vpop.permute.xlu0 %2014
  %2018 = vset.pattern.permute.xlu0 4
  %2019 = vperm.xlu0 %2018, %v1956
  %v2020 = vpop.permute.xlu0 %2019
  %2023 = vset.pattern.permute.xlu0 4
  %2024 = vperm.xlu0 %2023, %v1957
  %v2025 = vpop.permute.xlu0 %2024
  %2028 = vset.pattern.permute.xlu0 4
  %2029 = vperm.xlu0 %2028, %v1958
  %v2030 = vpop.permute.xlu0 %2029
  %2033 = vset.pattern.permute.xlu0 4
  %2034 = vperm.xlu0 %2033, %v1959
  %v2035 = vpop.permute.xlu0 %2034
  %2038 = vset.pattern.permute.xlu0 4
  %2039 = vperm.xlu0 %2038, %v1960
  %v2040 = vpop.permute.xlu0 %2039
  %2043 = vset.pattern.permute.xlu0 4
  %2044 = vperm.xlu0 %2043, %v1961
  %v2045 = vpop.permute.xlu0 %2044
  %v2047 = vsub.f32 %v1578, %v1970
  %v2048 = vsub.f32 %v1579, %v1975
  %v2049 = vsub.f32 %v1580, %v1980
  %v2050 = vsub.f32 %v1581, %v1985
  %v2051 = vsub.f32 %v1582, %v1990
  %v2052 = vsub.f32 %v1583, %v1995
  %v2053 = vsub.f32 %v1584, %v2000
  %v2054 = vsub.f32 %v1585, %v2005
  %v2055 = vsub.f32 %v1586, %v2010
  %v2056 = vsub.f32 %v1587, %v2015
  %v2057 = vsub.f32 %v1588, %v2020
  %v2058 = vsub.f32 %v1589, %v2025
  %v2059 = vsub.f32 %v1590, %v2030
  %v2060 = vsub.f32 %v1591, %v2035
  %v2061 = vsub.f32 %v1592, %v2040
  %v2062 = vsub.f32 %v1593, %v2045
  %v2063 = vsel %vm1966, %v2047, %v1578
  %v2064 = vsel %vm1966, %v2048, %v1579
  %v2065 = vsel %vm1966, %v2049, %v1580
  %v2066 = vsel %vm1966, %v2050, %v1581
  %v2067 = vsel %vm1966, %v2051, %v1582
  %v2068 = vsel %vm1966, %v2052, %v1583
  %v2069 = vsel %vm1966, %v2053, %v1584
  %v2070 = vsel %vm1966, %v2054, %v1585
  %v2071 = vsel %vm1966, %v2055, %v1586
  %v2072 = vsel %vm1966, %v2056, %v1587
  %v2073 = vsel %vm1966, %v2057, %v1588
  %v2074 = vsel %vm1966, %v2058, %v1589
  %v2075 = vsel %vm1966, %v2059, %v1590
  %v2076 = vsel %vm1966, %v2060, %v1591
  %v2077 = vsel %vm1966, %v2061, %v1592
  %v2078 = vsel %vm1966, %v2062, %v1593
  %2079 = vst.msk [vmem:[%s9] sm:$0xff] %vm52, %v2063
  %2080 = vst.msk [vmem:[%s9 + $0x8] sm:$0xff] %vm52, %v2064
  %2081 = vst.msk [vmem:[%s9 + $0x10] sm:$0xff] %vm52, %v2065
  %2082 = vst.msk [vmem:[%s9 + $0x18] sm:$0xff] %vm52, %v2066
  %2083 = vst.msk [vmem:[%s9 + $0x20] sm:$0xff] %vm52, %v2067
  %2084 = vst.msk [vmem:[%s9 + $0x28] sm:$0xff] %vm52, %v2068
  %2085 = vst.msk [vmem:[%s9 + $0x30] sm:$0xff] %vm52, %v2069
  %2086 = vst.msk [vmem:[%s9 + $0x38] sm:$0xff] %vm52, %v2070
  %2087 = vst.msk [vmem:[%s9 + $0x40] sm:$0xff] %vm52, %v2071
  %2088 = vst.msk [vmem:[%s9 + $0x48] sm:$0xff] %vm52, %v2072
  %2089 = vst.msk [vmem:[%s9 + $0x50] sm:$0xff] %vm52, %v2073
  %2090 = vst.msk [vmem:[%s9 + $0x58] sm:$0xff] %vm52, %v2074
  %2091 = vst.msk [vmem:[%s9 + $0x60] sm:$0xff] %vm52, %v2075
  %2092 = vst.msk [vmem:[%s9 + $0x68] sm:$0xff] %vm52, %v2076
  %2093 = vst.msk [vmem:[%s9 + $0x70] sm:$0xff] %vm52, %v2077
  %2094 = vst.msk [vmem:[%s9 + $0x78] sm:$0xff] %vm52, %v2078
  // Predicated region
  $region38: #{_goal_dqn_forward_impl.1} parent=0 // pred_check
    _
  $region39: #{_goal_dqn_forward_impl.1} parent=0 // pred_check_branch
    %2096 = sbr.rel (0) target = $region41
  $region40: #{_goal_dqn_forward_impl.1} parent=0 // pred_region
    _
  $region41: #{_goal_dqn_forward_impl.1} parent=0 // pred_fallthru
    _
  // Predicated region
  $region42: #{_goal_dqn_forward_impl.1} parent=0 // pred_check
    _
  $region43: #{_goal_dqn_forward_impl.1} parent=0 // pred_check_branch
    %2098 = sbr.rel (0) target = $region45
  $region44: #{_goal_dqn_forward_impl.1} parent=0 // pred_region
    _
  $region45: #{_goal_dqn_forward_impl.1} parent=0 // pred_fallthru
    _

</llo_original>
